<compile_context>
chip_gen: v5e
topology: v5e:2x2
jax: 0.10.0
libtpu: 0.0.40
codegen_flags: <defaults>
</compile_context>

<pallas_src>
import functools

import jax
import jax.numpy as jnp
from jax import lax
from jax.experimental import pallas as pl
from jax.experimental.pallas import tpu as pltpu


# ---------------------------------------------------------------------------
# Fused kernel: grid = (batch_tiles, num_layers)
#   step (i, l): apply self-attn layer l to the residual stream (VMEM scratch);
#   on the last l also apply (optional) cross-attn and the adapter MLP.
# ---------------------------------------------------------------------------
def _image_adapter_kernel(*refs, num_layers, has_cross):
    if has_cross:
        (x_ref, cross_ref, sa_w_ref, sa_b_ref,
         ca_wq_ref, ca_bq_ref, ca_wkv_ref, ca_bkv_ref,
         w1_ref, b1_ref, w2_ref, b2_ref,
         o_ref, feat_ref) = refs
    else:
        (x_ref, sa_w_ref, sa_b_ref,
         w1_ref, b1_ref, w2_ref, b2_ref,
         o_ref, feat_ref) = refs
        cross_ref = ca_wq_ref = ca_bq_ref = ca_wkv_ref = ca_bkv_ref = None

    bt, S, H = x_ref.shape
    cd = w1_ref.dtype                    # compute dtype == stored weight dtype
    approx = cd != jnp.float32           # EUP approx reciprocal only on bf16 path
    layer = pl.program_id(1)

    # Initialize the residual-stream accumulator on the first layer step.
    @pl.when(layer == 0)
    def _init():
        feat_ref[...] = x_ref[...].astype(jnp.float32)

    def attn_core(q3, k3, v3):
        # q3: (bt, S, H); k3/v3: (bt, Skv, H). Contract last axes -> no k.T.
        # 1/sqrt(H) is already folded into the Q projection at prep time.
        s = lax.dot_general(q3.astype(cd), k3.astype(cd),
                            (((2,), (2,)), ((0,), (0,))),
                            preferred_element_type=jnp.float32)
        # TODO(synk): for S/Skv >= ~1-2K, tile the KV axis with an online
        # softmax instead of materializing the full (bt, S, Skv) score block.
        m = jnp.max(s, axis=-1, keepdims=True)
        e = jnp.exp(s - m)
        p = e * pl.reciprocal(jnp.sum(e, axis=-1, keepdims=True), approx=approx)
        return lax.dot_general(p.astype(cd), v3.astype(cd),
                               (((2,), (1,)), ((0,), (0,))),
                               preferred_element_type=jnp.float32)

    feat = feat_ref[...].reshape(bt * S, H)          # f32 residual stream

    # ---- self-attention layer `layer` (fused QKV matmul) ----
    w = sa_w_ref[0]                                  # (H, 3H), compute dtype
    b = sa_b_ref[0]                                  # (1, 3H), f32
    qkv = jnp.dot(feat.astype(cd), w, preferred_element_type=jnp.float32) + b
    qkv = qkv.reshape(bt, S, 3 * H)
    # NOTE: these lane slices hit 128-lane boundaries only when H % 128 == 0
    # (true at the module default H=1024); other H is correct but incurs
    # relayout copies — fall back to separate Q/K/V matmuls if that matters.
    q = qkv[..., :H]
    k = qkv[..., H:2 * H]
    v = qkv[..., 2 * H:]
    feat = feat + attn_core(q, k, v).reshape(bt * S, H)     # residual add
    feat_ref[...] = feat.reshape(bt, S, H)

    # ---- after the last self-attn layer: cross-attn (+res) and adapter ----
    @pl.when(layer == num_layers - 1)
    def _finish():
        f = feat
        if has_cross:
            Skv = cross_ref.shape[1]
            cross = cross_ref[...].reshape(bt * Skv, H).astype(cd)
            qc = (jnp.dot(f.astype(cd), ca_wq_ref[...],
                          preferred_element_type=jnp.float32)
                  + ca_bq_ref[...]).reshape(bt, S, H)
            kv = (jnp.dot(cross, ca_wkv_ref[...],
                          preferred_element_type=jnp.float32)
                  + ca_bkv_ref[...]).reshape(bt, Skv, 2 * H)
            f = f + attn_core(qc, kv[..., :H], kv[..., H:]).reshape(bt * S, H)

        # adapter: Linear -> ReLU -> Linear (no residual)
        h1 = jnp.dot(f.astype(cd), w1_ref[...],
                     preferred_element_type=jnp.float32) + b1_ref[...]
        h1 = jnp.maximum(h1, 0.0)
        out = jnp.dot(h1.astype(cd), w2_ref[...],
                      preferred_element_type=jnp.float32) + b2_ref[...]
        o_ref[...] = out.reshape(bt, S, H).astype(o_ref.dtype)
    # note: self.sigmoid is defined in __init__ but unused in forward — omitted.


# ---------------------------------------------------------------------------
# Chip-aware helpers
# ---------------------------------------------------------------------------
def _device_kind():
    try:
        return jax.devices()[0].device_kind.lower()
    except Exception:
        return ""


def _tpu_vmem_capacity_bytes():
    try:
        cap = int(pltpu.get_tpu_info().vmem_capacity_bytes)
        if cap > 0:
            return cap
    except Exception:
        pass
    kind = _device_kind()
    # v7x has 64 MiB per TensorCore; v5e/v6e have 128 MiB.
    return (64 << 20) if ("v7" in kind or "7x" in kind) else (128 << 20)


def _pick_batch_tile(B, S):
    """Split the batch across grid steps only on multi-TensorCore chips (v7x),
    and only when each half still presents a large matmul M dimension.
    On single-TC v5e/v6e, splitting only shrinks M and adds grid overhead."""
    kind = _device_kind()
    multi_tc = ("v7" in kind) or ("7x" in kind)
    if multi_tc and B % 2 == 0 and (B // 2) * S >= 256:
        return B // 2
    return B


# ---------------------------------------------------------------------------
# Wrapper
# ---------------------------------------------------------------------------
@jax.jit
def image_adapter_forward(prep, feature, cross_attention_input=None):
    B, S, H = feature.shape
    L = prep["sa_w"].shape[0]
    has_cross = cross_attention_input is not None

    bt = _pick_batch_tile(B, S)
    grid = (B // bt, L)   # layer axis innermost (fastest varying)

    x_spec = pl.BlockSpec((bt, S, H), lambda i, l: (i, 0, 0))
    out_spec = pl.BlockSpec((bt, S, H), lambda i, l: (i, 0, 0))

    def const_spec(arr):
        nd = arr.ndim
        return pl.BlockSpec(arr.shape, lambda i, l: (0,) * nd)

    args = [feature]
    in_specs = [x_spec]
    if has_cross:
        Skv = cross_attention_input.shape[1]
        args.append(cross_attention_input)
        in_specs.append(pl.BlockSpec((bt, Skv, H), lambda i, l: (i, 0, 0)))
    else:
        Skv = 0

    # Per-layer self-attention weights: only one layer's (H, 3H) block is
    # resident at a time, indexed by the layer grid axis (next layer's block
    # is prefetched by the pipeline while the current layer computes).
    args += [prep["sa_w"], prep["sa_b"]]
    in_specs += [pl.BlockSpec((1, H, 3 * H), lambda i, l: (l, 0, 0)),
                 pl.BlockSpec((1, 1, 3 * H), lambda i, l: (l, 0, 0))]

    const_args = []
    if has_cross:
        const_args += [prep["ca_wq"], prep["ca_bq"],
                       prep["ca_wkv"], prep["ca_bkv"]]
    const_args += [prep["w1"], prep["b1"], prep["w2"], prep["b2"]]
    args += const_args
    in_specs += [const_spec(a) for a in const_args]

    # ---- VMEM budget (blocks are double-buffered by the pipeline) ----
    w_item = prep["w1"].dtype.itemsize
    x_item = feature.dtype.itemsize
    act = bt * S * H
    layer_w_bytes = H * 3 * H * w_item + 3 * H * 4
    const_w_bytes = sum(int(a.size) * a.dtype.itemsize for a in const_args)
    io_bytes = 2 * act * x_item
    if has_cross:
        io_bytes += bt * Skv * H * cross_attention_input.dtype.itemsize
    blk_bytes = 2 * (layer_w_bytes + const_w_bytes + io_bytes)
    # f32 in-kernel intermediates: residual stream (x2), qkv (3H wide),
    # score block, attention output, h1.
    kvlen = max(S, Skv) if has_cross else S
    inter_bytes = 4 * (2 * act + 3 * act + bt * S * kvlen + act + act)
    est = blk_bytes + 4 * act + inter_bytes          # + feat scratch

    cap = _tpu_vmem_capacity_bytes()
    vmem_limit = int(min(int(0.85 * cap), max(est, 32 << 20)))

    kernel = functools.partial(_image_adapter_kernel,
                               num_layers=L, has_cross=has_cross)

    return pl.pallas_call(
        kernel,
        out_shape=jax.ShapeDtypeStruct((B, S, H), feature.dtype),
        grid_spec=pltpu.PrefetchScalarGridSpec(
            num_scalar_prefetch=0,
            grid=grid,
            in_specs=in_specs,
            out_specs=out_spec,
            scratch_shapes=[pltpu.VMEM((bt, S, H), jnp.float32)]),
        compiler_params=pltpu.CompilerParams(
            dimension_semantics=("parallel", "arbitrary"),
            vmem_limit_bytes=vmem_limit),
    )(*args)


# ---------------------------------------------------------------------------
# Parameter construction (PyTorch-style: W stored as (out, in)) + prep
# ---------------------------------------------------------------------------
def _linear_params(key, hidden):
    kw, kb = jax.random.split(key)
    bound = 1.0 / (hidden ** 0.5)
    w = jax.random.uniform(kw, (hidden, hidden), jnp.float32, -bound, bound)
    b = jax.random.uniform(kb, (hidden,), jnp.float32, -bound, bound)
    return w, b


def init_image_adapter_params(key, hidden_size, num_layers=2):
    params = {"self_attn": [], "cross_attn": None, "adapter": None}
    keys = jax.random.split(key, num_layers + 2)
    for i in range(num_layers):
        sk = jax.random.split(keys[i], 3)
        params["self_attn"].append({
            "q": _linear_params(sk[0], hidden_size),
            "k": _linear_params(sk[1], hidden_size),
            "v": _linear_params(sk[2], hidden_size),
        })
    ck = jax.random.split(keys[num_layers], 3)
    params["cross_attn"] = {
        "q": _linear_params(ck[0], hidden_size),
        "k": _linear_params(ck[1], hidden_size),
        "v": _linear_params(ck[2], hidden_size),
    }
    ak = jax.random.split(keys[num_layers + 1], 2)
    params["adapter"] = {
        "l1": _linear_params(ak[0], hidden_size),
        "l2": _linear_params(ak[1], hidden_size),
    }
    return params


def prepare_params(params, compute_dtype=jnp.bfloat16):
    """One-time prep (outside jit):
      * pre-transpose so y = x @ W + b,
      * fuse self-attn Q/K/V weights into (H, 3H) with the 1/sqrt(H) score
        scale folded into the Q columns,
      * split cross-attn into Wq (H,H) and Wkv (H,2H),
      * store matmul weights in `compute_dtype` (bf16 by default: MXU-native,
        half the HBM->VMEM DMA and VMEM residency); biases stay f32."""
    cd = jnp.dtype(compute_dtype)
    H = params["adapter"]["l1"][0].shape[0]
    scale = 1.0 / (H ** 0.5)

    def fuse_qkv(p):
        (wq, bq), (wk, bk), (wv, bv) = p["q"], p["k"], p["v"]
        w = jnp.concatenate([wq.T * scale, wk.T, wv.T], axis=1)      # (H, 3H)
        b = jnp.concatenate([bq * scale, bk, bv])[None, :]           # (1, 3H)
        return w.astype(cd), b.astype(jnp.float32)

    sa = [fuse_qkv(layer) for layer in params["self_attn"]]
    sa_w = jnp.stack([w for w, _ in sa])                             # (L, H, 3H)
    sa_b = jnp.stack([b for _, b in sa])                             # (L, 1, 3H)

    cp = params["cross_attn"]
    (wq, bq), (wk, bk), (wv, bv) = cp["q"], cp["k"], cp["v"]
    ca_wq = (wq.T * scale).astype(cd)                                # (H, H)
    ca_bq = (bq * scale)[None, :].astype(jnp.float32)                # (1, H)
    ca_wkv = jnp.concatenate([wk.T, wv.T], axis=1).astype(cd)        # (H, 2H)
    ca_bkv = jnp.concatenate([bk, bv])[None, :].astype(jnp.float32)  # (1, 2H)

    (w1, b1), (w2, b2) = params["adapter"]["l1"], params["adapter"]["l2"]
    return {"sa_w": sa_w, "sa_b": sa_b,
            "ca_wq": ca_wq, "ca_bq": ca_bq,
            "ca_wkv": ca_wkv, "ca_bkv": ca_bkv,
            "w1": w1.T.astype(cd), "b1": b1[None, :].astype(jnp.float32),
            "w2": w2.T.astype(cd), "b2": b2[None, :].astype(jnp.float32)}


# ---------------------------------------------------------------------------
# Pure-JAX reference for a sanity check
# ---------------------------------------------------------------------------
def _ref_attn(x, kv, p):
    (wq, bq), (wk, bk), (wv, bv) = p["q"], p["k"], p["v"]
    q = x @ wq.T + bq
    k = kv @ wk.T + bk
    v = kv @ wv.T + bv
    s = jnp.einsum("bqh,bkh->bqk", q, k) / (kv.shape[-1] ** 0.5)
    a = jax.nn.softmax(s, axis=-1)
    return jnp.einsum("bqk,bkh->bqh", a, v)


def _ref_forward(params, feature, cross):
    for layer in params["self_attn"]:
        feature = _ref_attn(feature, feature, layer) + feature
    if cross is not None:
        feature = _ref_attn(feature, cross, params["cross_attn"]) + feature
    (w1, b1), (w2, b2) = params["adapter"]["l1"], params["adapter"]["l2"]
    h = jnp.maximum(feature @ w1.T + b1, 0.0)
    return h @ w2.T + b2


# ---------------------------------------------------------------------------
if __name__ == "__main__":
    B, S, S_KV, H = 2, 8, 8, 32   # small shapes; module default hidden=1024

    key = jax.random.PRNGKey(0)
    k_feat, k_cross, k_params = jax.random.split(key, 3)
    feature = jax.random.normal(k_feat, (B, S, H), jnp.float32)
    cross_in = jax.random.normal(k_cross, (B, S_KV, H), jnp.float32)

    params = init_image_adapter_params(k_params, H, num_layers=2)
    ref = _ref_forward(params, feature, cross_in)
    ref_nc = _ref_forward(params, feature, None)

    # --- f32 compute path (strict tolerance) ---
    prep32 = prepare_params(params, compute_dtype=jnp.float32)
    out = jax.block_until_ready(image_adapter_forward(prep32, feature, cross_in))
    assert out.shape == (B, S, H)
    assert jnp.allclose(out, ref, atol=1e-4, rtol=1e-4), "mismatch vs reference (cross, f32)"

    out_nc = jax.block_until_ready(image_adapter_forward(prep32, feature, None))
    assert jnp.allclose(out_nc, ref_nc, atol=1e-4, rtol=1e-4), "mismatch vs reference (no cross, f32)"

    # --- bf16 weight / MXU path (default; looser tolerance) ---
    prep_bf16 = prepare_params(params)   # compute_dtype defaults to bf16
    out_bf = jax.block_until_ready(image_adapter_forward(prep_bf16, feature, cross_in))
    assert jnp.allclose(out_bf, ref, atol=5e-2, rtol=5e-2), "mismatch vs reference (cross, bf16)"

    print("KERNEL_OK")
</pallas_src>

<mosaic_0001>
module attributes {stable_mosaic.version = 11 : i64} {
  func.func @_image_adapter_kernel(%arg0: i32, %arg1: i32, %arg2: memref<2x8x32xf32, #tpu.memory_space<vmem>>, %arg3: memref<2x8x32xf32, #tpu.memory_space<vmem>>, %arg4: memref<1x32x96xf32, #tpu.memory_space<vmem>>, %arg5: memref<1x1x96xf32, #tpu.memory_space<vmem>>, %arg6: memref<32x32xf32, #tpu.memory_space<vmem>>, %arg7: memref<1x32xf32, #tpu.memory_space<vmem>>, %arg8: memref<32x64xf32, #tpu.memory_space<vmem>>, %arg9: memref<1x64xf32, #tpu.memory_space<vmem>>, %arg10: memref<32x32xf32, #tpu.memory_space<vmem>>, %arg11: memref<1x32xf32, #tpu.memory_space<vmem>>, %arg12: memref<32x32xf32, #tpu.memory_space<vmem>>, %arg13: memref<1x32xf32, #tpu.memory_space<vmem>>, %arg14: memref<2x8x32xf32, #tpu.memory_space<vmem>>, %arg15: memref<2x8x32xf32, #tpu.memory_space<vmem>>) attributes {dimension_semantics = [#tpu.dimension_semantics<parallel>, #tpu.dimension_semantics<arbitrary>], iteration_bounds = array<i64: 1, 2>, scalar_prefetch = 0 : i64, scratch_operands = 1 : i64, tpu.core_type = #tpu.core_type<tc>, window_params = [{transform_indices = @transform_0, window_bounds = array<i64: 2, 8, 32>}, {transform_indices = @transform_1, window_bounds = array<i64: 2, 8, 32>}, {transform_indices = @transform_2, window_bounds = array<i64: 1, 32, 96>}, {transform_indices = @transform_3, window_bounds = array<i64: 1, 1, 96>}, {pipeline_mode = #tpu.pipeline_mode<synchronous>, transform_indices = @transform_4, window_bounds = array<i64: 32, 32>}, {pipeline_mode = #tpu.pipeline_mode<synchronous>, transform_indices = @transform_5, window_bounds = array<i64: 1, 32>}, {pipeline_mode = #tpu.pipeline_mode<synchronous>, transform_indices = @transform_6, window_bounds = array<i64: 32, 64>}, {pipeline_mode = #tpu.pipeline_mode<synchronous>, transform_indices = @transform_7, window_bounds = array<i64: 1, 64>}, {pipeline_mode = #tpu.pipeline_mode<synchronous>, transform_indices = @transform_8, window_bounds = array<i64: 32, 32>}, {pipeline_mode = #tpu.pipeline_mode<synchronous>, transform_indices = @transform_9, window_bounds = array<i64: 1, 32>}, {pipeline_mode = #tpu.pipeline_mode<synchronous>, transform_indices = @transform_10, window_bounds = array<i64: 32, 32>}, {pipeline_mode = #tpu.pipeline_mode<synchronous>, transform_indices = @transform_11, window_bounds = array<i64: 1, 32>}, {transform_indices = @transform_12, window_bounds = array<i64: 2, 8, 32>}]} {
    %c0_i32 = arith.constant 0 : i32
    %0 = arith.cmpi eq, %arg1, %c0_i32 : i32
    %1 = arith.extui %0 : i1 to i32
    %c0_i32_0 = arith.constant 0 : i32
    %2 = arith.cmpi ne, %1, %c0_i32_0 : i32
    scf.if %2 {
      %c0_17 = arith.constant 0 : index
      %c0_18 = arith.constant 0 : index
      %c0_19 = arith.constant 0 : index
      %35 = vector.load %arg2[%c0_17, %c0_18, %c0_19] : memref<2x8x32xf32, #tpu.memory_space<vmem>>, vector<2x8x32xf32>
      %c0_20 = arith.constant 0 : index
      %c0_21 = arith.constant 0 : index
      %c0_22 = arith.constant 0 : index
      %36 = vector.load %arg15[%c0_20, %c0_21, %c0_22] : memref<2x8x32xf32, #tpu.memory_space<vmem>>, vector<2x8x32xf32>
      tpu.vector_store %arg15[%c0_20, %c0_21, %c0_22], %35 {strides = array<i32>} : memref<2x8x32xf32, #tpu.memory_space<vmem>>, vector<2x8x32xf32>,
    } else {
    }
    %c0 = arith.constant 0 : index
    %c0_1 = arith.constant 0 : index
    %c0_2 = arith.constant 0 : index
    %3 = vector.load %arg15[%c0, %c0_1, %c0_2] : memref<2x8x32xf32, #tpu.memory_space<vmem>>, vector<2x8x32xf32>
    %4 = vector.shape_cast %3 : vector<2x8x32xf32> to vector<16x32xf32>
    %c0_3 = arith.constant 0 : index
    %c0_4 = arith.constant 0 : index
    %c0_5 = arith.constant 0 : index
    %5 = vector.load %arg4[%c0_3, %c0_4, %c0_5] : memref<1x32x96xf32, #tpu.memory_space<vmem>>, vector<1x32x96xf32>
    %6 = vector.shape_cast %5 : vector<1x32x96xf32> to vector<32x96xf32>
    %c0_6 = arith.constant 0 : index
    %c0_7 = arith.constant 0 : index
    %c0_8 = arith.constant 0 : index
    %7 = vector.load %arg5[%c0_6, %c0_7, %c0_8] : memref<1x1x96xf32, #tpu.memory_space<vmem>>, vector<1x1x96xf32>
    %8 = vector.shape_cast %7 : vector<1x1x96xf32> to vector<1x96xf32>
    %cst = arith.constant dense<0.000000e+00> : vector<16x96xf32>
    %9 = tpu.matmul %4, %6, %cst {dimension_numbers = #tpu.dot_dimension_numbers<[1], [0], [0], [1], [0, 0, 1, 1], [], []>} : vector<16x32xf32>, vector<32x96xf32>, vector<16x96xf32> -> vector<16x96xf32>
    %10 = vector.broadcast %8 : vector<1x96xf32> to vector<16x96xf32>
    %11 = arith.addf %9, %10 : vector<16x96xf32>
    %12 = vector.shape_cast %11 : vector<16x96xf32> to vector<2x8x96xf32>
    %13 = vector.extract_strided_slice %12 {offsets = [0, 0, 0], sizes = [2, 8, 32], strides = [1, 1, 1]} : vector<2x8x96xf32> to vector<2x8x32xf32>
    %14 = vector.extract_strided_slice %12 {offsets = [0, 0, 32], sizes = [2, 8, 32], strides = [1, 1, 1]} : vector<2x8x96xf32> to vector<2x8x32xf32>
    %15 = vector.extract_strided_slice %12 {offsets = [0, 0, 64], sizes = [2, 8, 32], strides = [1, 1, 1]} : vector<2x8x96xf32> to vector<2x8x32xf32>
    %cst_9 = arith.constant dense<0.000000e+00> : vector<2x8x8xf32>
    %16 = tpu.matmul %13, %14, %cst_9 {dimension_numbers = #tpu.dot_dimension_numbers<[2], [2], [1], [1], [0, 0, 0, 1, 1, 1], [0], [0]>} : vector<2x8x32xf32>, vector<2x8x32xf32>, vector<2x8x8xf32> -> vector<2x8x8xf32>
    %cst_10 = arith.constant dense<0xFF800000> : vector<2x8xf32>
    %17 = vector.multi_reduction <maximumf>, %16, %cst_10 [2] : vector<2x8x8xf32> to vector<2x8xf32>
    %18 = vector.shape_cast %17 : vector<2x8xf32> to vector<2x8x1xf32>
    %19 = vector.broadcast %18 : vector<2x8x1xf32> to vector<2x8x8xf32>
    %20 = arith.subf %16, %19 : vector<2x8x8xf32>
    %21 = math.exp %20 : vector<2x8x8xf32>
    %cst_11 = arith.constant dense<0.000000e+00> : vector<2x8xf32>
    %22 = vector.multi_reduction <add>, %21, %cst_11 [2] : vector<2x8x8xf32> to vector<2x8xf32>
    %23 = vector.shape_cast %22 : vector<2x8xf32> to vector<2x8x1xf32>
    %24 = tpu.reciprocal %23 : vector<2x8x1xf32> -> vector<2x8x1xf32>
    %25 = vector.broadcast %24 : vector<2x8x1xf32> to vector<2x8x8xf32>
    %26 = arith.mulf %21, %25 : vector<2x8x8xf32>
    %cst_12 = arith.constant dense<0.000000e+00> : vector<2x8x32xf32>
    %27 = tpu.matmul %26, %15, %cst_12 {dimension_numbers = #tpu.dot_dimension_numbers<[2], [1], [1], [2], [0, 0, 0, 1, 1, 2], [0], [0]>} : vector<2x8x8xf32>, vector<2x8x32xf32>, vector<2x8x32xf32> -> vector<2x8x32xf32>
    %28 = vector.shape_cast %27 : vector<2x8x32xf32> to vector<16x32xf32>
    %29 = arith.addf %4, %28 : vector<16x32xf32>
    %30 = vector.shape_cast %29 : vector<16x32xf32> to vector<2x8x32xf32>
    %c0_13 = arith.constant 0 : index
    %c0_14 = arith.constant 0 : index
    %c0_15 = arith.constant 0 : index
    %31 = vector.load %arg15[%c0_13, %c0_14, %c0_15] : memref<2x8x32xf32, #tpu.memory_space<vmem>>, vector<2x8x32xf32>
    tpu.vector_store %arg15[%c0_13, %c0_14, %c0_15], %30 {strides = array<i32>} : memref<2x8x32xf32, #tpu.memory_space<vmem>>, vector<2x8x32xf32>,
    %c1_i32 = arith.constant 1 : i32
    %32 = arith.cmpi eq, %arg1, %c1_i32 : i32
    %33 = arith.extui %32 : i1 to i32
    %c0_i32_16 = arith.constant 0 : i32
    %34 = arith.cmpi ne, %33, %c0_i32_16 : i32
    scf.if %34 {
      %c0_17 = arith.constant 0 : index
      %c0_18 = arith.constant 0 : index
      %c0_19 = arith.constant 0 : index
      %35 = vector.load %arg3[%c0_17, %c0_18, %c0_19] : memref<2x8x32xf32, #tpu.memory_space<vmem>>, vector<2x8x32xf32>
      %36 = vector.shape_cast %35 : vector<2x8x32xf32> to vector<16x32xf32>
      %c0_20 = arith.constant 0 : index
      %c0_21 = arith.constant 0 : index
      %37 = vector.load %arg6[%c0_20, %c0_21] : memref<32x32xf32, #tpu.memory_space<vmem>>, vector<32x32xf32>
      %cst_22 = arith.constant dense<0.000000e+00> : vector<16x32xf32>
      %38 = tpu.matmul %29, %37, %cst_22 {dimension_numbers = #tpu.dot_dimension_numbers<[1], [0], [0], [1], [0, 0, 1, 1], [], []>} : vector<16x32xf32>, vector<32x32xf32>, vector<16x32xf32> -> vector<16x32xf32>
      %c0_23 = arith.constant 0 : index
      %c0_24 = arith.constant 0 : index
      %39 = vector.load %arg7[%c0_23, %c0_24] : memref<1x32xf32, #tpu.memory_space<vmem>>, vector<1x32xf32>
      %40 = vector.broadcast %39 : vector<1x32xf32> to vector<16x32xf32>
      %41 = arith.addf %38, %40 : vector<16x32xf32>
      %42 = vector.shape_cast %41 : vector<16x32xf32> to vector<2x8x32xf32>
      %c0_25 = arith.constant 0 : index
      %c0_26 = arith.constant 0 : index
      %43 = vector.load %arg8[%c0_25, %c0_26] : memref<32x64xf32, #tpu.memory_space<vmem>>, vector<32x64xf32>
      %cst_27 = arith.constant dense<0.000000e+00> : vector<16x64xf32>
      %44 = tpu.matmul %36, %43, %cst_27 {dimension_numbers = #tpu.dot_dimension_numbers<[1], [0], [0], [1], [0, 0, 1, 1], [], []>} : vector<16x32xf32>, vector<32x64xf32>, vector<16x64xf32> -> vector<16x64xf32>
      %c0_28 = arith.constant 0 : index
      %c0_29 = arith.constant 0 : index
      %45 = vector.load %arg9[%c0_28, %c0_29] : memref<1x64xf32, #tpu.memory_space<vmem>>, vector<1x64xf32>
      %46 = vector.broadcast %45 : vector<1x64xf32> to vector<16x64xf32>
      %47 = arith.addf %44, %46 : vector<16x64xf32>
      %48 = vector.shape_cast %47 : vector<16x64xf32> to vector<2x8x64xf32>
      %49 = vector.extract_strided_slice %48 {offsets = [0, 0, 0], sizes = [2, 8, 32], strides = [1, 1, 1]} : vector<2x8x64xf32> to vector<2x8x32xf32>
      %50 = vector.extract_strided_slice %48 {offsets = [0, 0, 32], sizes = [2, 8, 32], strides = [1, 1, 1]} : vector<2x8x64xf32> to vector<2x8x32xf32>
      %cst_30 = arith.constant dense<0.000000e+00> : vector<2x8x8xf32>
      %51 = tpu.matmul %42, %49, %cst_30 {dimension_numbers = #tpu.dot_dimension_numbers<[2], [2], [1], [1], [0, 0, 0, 1, 1, 1], [0], [0]>} : vector<2x8x32xf32>, vector<2x8x32xf32>, vector<2x8x8xf32> -> vector<2x8x8xf32>
      %cst_31 = arith.constant dense<0xFF800000> : vector<2x8xf32>
      %52 = vector.multi_reduction <maximumf>, %51, %cst_31 [2] : vector<2x8x8xf32> to vector<2x8xf32>
      %53 = vector.shape_cast %52 : vector<2x8xf32> to vector<2x8x1xf32>
      %54 = vector.broadcast %53 : vector<2x8x1xf32> to vector<2x8x8xf32>
      %55 = arith.subf %51, %54 : vector<2x8x8xf32>
      %56 = math.exp %55 : vector<2x8x8xf32>
      %cst_32 = arith.constant dense<0.000000e+00> : vector<2x8xf32>
      %57 = vector.multi_reduction <add>, %56, %cst_32 [2] : vector<2x8x8xf32> to vector<2x8xf32>
      %58 = vector.shape_cast %57 : vector<2x8xf32> to vector<2x8x1xf32>
      %59 = tpu.reciprocal %58 : vector<2x8x1xf32> -> vector<2x8x1xf32>
      %60 = vector.broadcast %59 : vector<2x8x1xf32> to vector<2x8x8xf32>
      %61 = arith.mulf %56, %60 : vector<2x8x8xf32>
      %cst_33 = arith.constant dense<0.000000e+00> : vector<2x8x32xf32>
      %62 = tpu.matmul %61, %50, %cst_33 {dimension_numbers = #tpu.dot_dimension_numbers<[2], [1], [1], [2], [0, 0, 0, 1, 1, 2], [0], [0]>} : vector<2x8x8xf32>, vector<2x8x32xf32>, vector<2x8x32xf32> -> vector<2x8x32xf32>
      %63 = vector.shape_cast %62 : vector<2x8x32xf32> to vector<16x32xf32>
      %64 = arith.addf %29, %63 : vector<16x32xf32>
      %c0_34 = arith.constant 0 : index
      %c0_35 = arith.constant 0 : index
      %65 = vector.load %arg10[%c0_34, %c0_35] : memref<32x32xf32, #tpu.memory_space<vmem>>, vector<32x32xf32>
      %cst_36 = arith.constant dense<0.000000e+00> : vector<16x32xf32>
      %66 = tpu.matmul %64, %65, %cst_36 {dimension_numbers = #tpu.dot_dimension_numbers<[1], [0], [0], [1], [0, 0, 1, 1], [], []>} : vector<16x32xf32>, vector<32x32xf32>, vector<16x32xf32> -> vector<16x32xf32>
      %c0_37 = arith.constant 0 : index
      %c0_38 = arith.constant 0 : index
      %67 = vector.load %arg11[%c0_37, %c0_38] : memref<1x32xf32, #tpu.memory_space<vmem>>, vector<1x32xf32>
      %68 = vector.broadcast %67 : vector<1x32xf32> to vector<16x32xf32>
      %69 = arith.addf %66, %68 : vector<16x32xf32>
      %cst_39 = arith.constant 0.000000e+00 : f32
      %70 = vector.broadcast %cst_39 : f32 to vector<16x32xf32>
      %71 = arith.maximumf %69, %70 : vector<16x32xf32>
      %c0_40 = arith.constant 0 : index
      %c0_41 = arith.constant 0 : index
      %72 = vector.load %arg12[%c0_40, %c0_41] : memref<32x32xf32, #tpu.memory_space<vmem>>, vector<32x32xf32>
      %cst_42 = arith.constant dense<0.000000e+00> : vector<16x32xf32>
      %73 = tpu.matmul %71, %72, %cst_42 {dimension_numbers = #tpu.dot_dimension_numbers<[1], [0], [0], [1], [0, 0, 1, 1], [], []>} : vector<16x32xf32>, vector<32x32xf32>, vector<16x32xf32> -> vector<16x32xf32>
      %c0_43 = arith.constant 0 : index
      %c0_44 = arith.constant 0 : index
      %74 = vector.load %arg13[%c0_43, %c0_44] : memref<1x32xf32, #tpu.memory_space<vmem>>, vector<1x32xf32>
      %75 = vector.broadcast %74 : vector<1x32xf32> to vector<16x32xf32>
      %76 = arith.addf %73, %75 : vector<16x32xf32>
      %77 = vector.shape_cast %76 : vector<16x32xf32> to vector<2x8x32xf32>
      %c0_45 = arith.constant 0 : index
      %c0_46 = arith.constant 0 : index
      %c0_47 = arith.constant 0 : index
      %78 = vector.load %arg14[%c0_45, %c0_46, %c0_47] : memref<2x8x32xf32, #tpu.memory_space<vmem>>, vector<2x8x32xf32>
      tpu.vector_store %arg14[%c0_45, %c0_46, %c0_47], %77 {strides = array<i32>} : memref<2x8x32xf32, #tpu.memory_space<vmem>>, vector<2x8x32xf32>,
    } else {
    }
    return
  }
  func.func @transform_0(%arg0: i32, %arg1: i32) -> (i32, i32, i32) {
    %c0_i32 = arith.constant 0 : i32
    %c0_i32_0 = arith.constant 0 : i32
    %c0_i32_1 = arith.constant 0 : i32
    return %arg0, %c0_i32, %c0_i32_0 : i32, i32, i32
  }
  func.func @transform_1(%arg0: i32, %arg1: i32) -> (i32, i32, i32) {
    %c0_i32 = arith.constant 0 : i32
    %c0_i32_0 = arith.constant 0 : i32
    %c0_i32_1 = arith.constant 0 : i32
    return %arg0, %c0_i32, %c0_i32_0 : i32, i32, i32
  }
  func.func @transform_2(%arg0: i32, %arg1: i32) -> (i32, i32, i32) {
    %c0_i32 = arith.constant 0 : i32
    %c0_i32_0 = arith.constant 0 : i32
    %c0_i32_1 = arith.constant 0 : i32
    return %arg1, %c0_i32, %c0_i32_0 : i32, i32, i32
  }
  func.func @transform_3(%arg0: i32, %arg1: i32) -> (i32, i32, i32) {
    %c0_i32 = arith.constant 0 : i32
    %c0_i32_0 = arith.constant 0 : i32
    %c0_i32_1 = arith.constant 0 : i32
    return %arg1, %c0_i32, %c0_i32_0 : i32, i32, i32
  }
  func.func @transform_4(%arg0: i32, %arg1: i32) -> (i32, i32) {
    %c0_i32 = arith.constant 0 : i32
    %c0_i32_0 = arith.constant 0 : i32
    %c0_i32_1 = arith.constant 0 : i32
    return %c0_i32, %c0_i32_0 : i32, i32
  }
  func.func @transform_5(%arg0: i32, %arg1: i32) -> (i32, i32) {
    %c0_i32 = arith.constant 0 : i32
    %c0_i32_0 = arith.constant 0 : i32
    %c0_i32_1 = arith.constant 0 : i32
    return %c0_i32, %c0_i32_0 : i32, i32
  }
  func.func @transform_6(%arg0: i32, %arg1: i32) -> (i32, i32) {
    %c0_i32 = arith.constant 0 : i32
    %c0_i32_0 = arith.constant 0 : i32
    %c0_i32_1 = arith.constant 0 : i32
    return %c0_i32, %c0_i32_0 : i32, i32
  }
  func.func @transform_7(%arg0: i32, %arg1: i32) -> (i32, i32) {
    %c0_i32 = arith.constant 0 : i32
    %c0_i32_0 = arith.constant 0 : i32
    %c0_i32_1 = arith.constant 0 : i32
    return %c0_i32, %c0_i32_0 : i32, i32
  }
  func.func @transform_8(%arg0: i32, %arg1: i32) -> (i32, i32) {
    %c0_i32 = arith.constant 0 : i32
    %c0_i32_0 = arith.constant 0 : i32
    %c0_i32_1 = arith.constant 0 : i32
    return %c0_i32, %c0_i32_0 : i32, i32
  }
  func.func @transform_9(%arg0: i32, %arg1: i32) -> (i32, i32) {
    %c0_i32 = arith.constant 0 : i32
    %c0_i32_0 = arith.constant 0 : i32
    %c0_i32_1 = arith.constant 0 : i32
    return %c0_i32, %c0_i32_0 : i32, i32
  }
  func.func @transform_10(%arg0: i32, %arg1: i32) -> (i32, i32) {
    %c0_i32 = arith.constant 0 : i32
    %c0_i32_0 = arith.constant 0 : i32
    %c0_i32_1 = arith.constant 0 : i32
    return %c0_i32, %c0_i32_0 : i32, i32
  }
  func.func @transform_11(%arg0: i32, %arg1: i32) -> (i32, i32) {
    %c0_i32 = arith.constant 0 : i32
    %c0_i32_0 = arith.constant 0 : i32
    %c0_i32_1 = arith.constant 0 : i32
    return %c0_i32, %c0_i32_0 : i32, i32
  }
  func.func @transform_12(%arg0: i32, %arg1: i32) -> (i32, i32, i32) {
    %c0_i32 = arith.constant 0 : i32
    %c0_i32_0 = arith.constant 0 : i32
    %c0_i32_1 = arith.constant 0 : i32
    return %arg0, %c0_i32, %c0_i32_0 : i32, i32, i32
  }
}

</mosaic_0001>

<llo_original>
// kernel: image_adapter_forward.1
$region0: #{image_adapter_forward.1}
  #allocation0 [shape = 'u32[]', space=smem, size = 0x4, offset = 0x4, fixed_abs, tag = 'smem constant byte address 0x4 - core index']
  #allocation1 [shape = 'u32[72,128]{1,0:T(1,128)}', space=vmem, size = 0x9000, scoped, tag = 'internal scratch']
  #allocation2 [shape = 'f32[2,8,32]{2,1,0:T(8,128)}', space=vmem, size = 0x2000, scoped, tag = 'scratch operand']
  %s0 = inlined_call_operand.hbm [shape: f32[2,8,32], index: 0, kind: input, shape index: {}]
  %s1 = inlined_call_operand.hbm [shape: f32[2,8,32], index: 1, kind: input, shape index: {}]
  %s2 = inlined_call_operand.hbm [shape: f32[2,32,96], index: 2, kind: input, shape index: {}]
  %s3 = inlined_call_operand.vmem [shape: f32[2,1,96], index: 3, kind: input, shape index: {}]
  %s4 = inlined_call_operand.hbm [shape: f32[32,32], index: 4, kind: input, shape index: {}]
  %s5 = inlined_call_operand.vmem [shape: f32[1,32], index: 5, kind: input, shape index: {}]
  %s6 = inlined_call_operand.hbm [shape: f32[32,64], index: 6, kind: input, shape index: {}]
  %s7 = inlined_call_operand.hbm [shape: f32[1,64], index: 7, kind: input, shape index: {}]
  %s8 = inlined_call_operand.hbm [shape: f32[32,32], index: 8, kind: input, shape index: {}]
  %s9 = inlined_call_operand.hbm [shape: f32[1,32], index: 9, kind: input, shape index: {}]
  %s10 = inlined_call_operand.hbm [shape: f32[32,32], index: 10, kind: input, shape index: {}]
  %s11 = inlined_call_operand.hbm [shape: f32[1,32], index: 11, kind: input, shape index: {}]
  %s12 = inlined_call_operand.hbm [shape: f32[2,8,32], index: 12, kind: output, shape index: {}]
  %s13 = sld [smem:[#allocation0]]
  $region129: #{image_adapter_forward.1} parent=0
    _
  %s15 = ssub.s32 1, %s13
  %s16 = scalar_select 0, %s15, %s13
  $region1: #{image_adapter_forward.1} parent=0
    #allocation3 [shape = 'u8[8192]{0}', space=vmem, size = 0x2000, scoped, tag = 'input window, operand 0, single buffered']
    #allocation4 [shape = 's32[2]{0}', space=sflag, size = 0x8, scoped, tag = 'scoped memory for image_adapter_forward.1']
    #allocation5 [shape = 's32[2]{0}', space=sflag, size = 0x8, scoped, tag = 'scoped memory for image_adapter_forward.1']
    #allocation6 [shape = 'u8[8192]{0}', space=vmem, size = 0x2000, scoped, tag = 'input window, operand 1, single buffered']
    #allocation7 [shape = 's32[1]{0}', space=sflag, size = 0x4, scoped, tag = 'scoped memory for image_adapter_forward.1']
    #allocation8 [shape = 'u8[32768]{0}', space=vmem, size = 0x8000, scoped, tag = 'input window, operand 2']
    #allocation9 [shape = 'u8[16384]{0}', space=vmem, size = 0x4000, scoped, tag = 'input window, operand 4, single buffered']
    #allocation10 [shape = 'u8[16384]{0}', space=vmem, size = 0x4000, scoped, tag = 'input window, operand 6, single buffered']
    #allocation11 [shape = 's32[1]{0}', space=sflag, size = 0x4, scoped, tag = 'scoped memory for image_adapter_forward.1']
    #allocation12 [shape = 'u8[512]{0}', space=vmem, size = 0x400, scoped, tag = 'input window, operand 7, single buffered']
    #allocation13 [shape = 'u8[16384]{0}', space=vmem, size = 0x4000, scoped, tag = 'input window, operand 8, single buffered']
    #allocation14 [shape = 's32[1]{0}', space=sflag, size = 0x4, scoped, tag = 'scoped memory for image_adapter_forward.1']
    #allocation15 [shape = 'u8[512]{0}', space=vmem, size = 0x400, scoped, tag = 'input window, operand 9, single buffered']
    #allocation16 [shape = 'u8[16384]{0}', space=vmem, size = 0x4000, scoped, tag = 'input window, operand 10, single buffered']
    #allocation17 [shape = 's32[1]{0}', space=sflag, size = 0x4, scoped, tag = 'scoped memory for image_adapter_forward.1']
    #allocation18 [shape = 'u8[512]{0}', space=vmem, size = 0x400, scoped, tag = 'input window, operand 11, single buffered']
    #allocation19 [shape = 'u8[8192]{0}', space=vmem, size = 0x2000, scoped, tag = 'output window, operand 0, single buffered']
    %17 = vsyncpa [#allocation4], 0
    %18 = vsyncpa [#allocation7], 0
    %19 = vsyncpa [#allocation11], 0
    %20 = vsyncpa [#allocation14], 0
    %21 = vsyncpa [#allocation17], 0
    %22 = vsyncpa [#allocation5], 0
    loop: start=0, step=1, limit=4
    $region2: #{image_adapter_forward.1} parent=1 // loop_pre_header
      _
    $region3: #{image_adapter_forward.1} parent=1 // loop_header
      %s24 = sphi 0, %s28
      %p25 = scmp.ge.s32.totalorder %s24, 4
      %s31 = sphi 0, %s43
      %s32 = sphi 0, %s39
      %s33 = sphi 0, %s31
      %s34 = sphi 0, %s32
      %s35 = sphi 0, %s33
      %s36 = sphi 0, %s34
      %s46 = sphi 0, %s48
      %s49 = sphi 0, %s46
      %s50 = sphi 0, %s49
      %s66 = sphi 0, %s50
      %s72 = sphi 0, %s74
      %s75 = sphi 0, %s72
      %s76 = sphi 0, %s75
      %s92 = sphi 0, %s76
      %s98 = sphi 0, %s100
      %s101 = sphi 0, %s98
      %s102 = sphi 0, %s101
      %s118 = sphi 0, %s102
      %s124 = sphi 0, %s126
      %s127 = sphi 0, %s124
      %s128 = sphi 0, %s127
      %s144 = sphi 0, %s128
      %s148 = sphi 0, %s148
      %s150 = sphi 0, %s148
      %s151 = sphi 0, %s150
      %s165 = sphi 0, %s151
      %s169 = sphi 0, %s169
      %s171 = sphi 0, %s169
      %s172 = sphi 0, %s171
      %s186 = sphi 0, %s172
      %s190 = sphi 0, %s190
      %s192 = sphi 0, %s190
      %s193 = sphi 0, %s192
      %s207 = sphi 0, %s193
      %s211 = sphi 0, %s211
      %s213 = sphi 0, %s211
      %s214 = sphi 0, %s213
      %s228 = sphi 0, %s214
      %s232 = sphi 0, %s232
      %s234 = sphi 0, %s232
      %s235 = sphi 0, %s234
      %s249 = sphi 0, %s235
      %s253 = sphi 0, %s253
      %s255 = sphi 0, %s253
      %s256 = sphi 0, %s255
      %s270 = sphi 0, %s256
      %s274 = sphi 0, %s274
      %s276 = sphi 0, %s274
      %s277 = sphi 0, %s276
      %s291 = sphi 0, %s277
      %s295 = sphi 0, %s295
      %s297 = sphi 0, %s295
      %s298 = sphi 0, %s297
      %s312 = sphi 0, %s298
      %s318 = sphi 0, %s320
      %s321 = sphi 0, %s318
      %s322 = sphi 0, %s321
      %s338 = sphi 0, %s322
    $region4: #{image_adapter_forward.1} parent=1 // loop_header_branch
      %27 = sbr.rel (%p25) target = $region8
    $region5: #{image_adapter_forward.1} parent=1 // loop_body
      %s29 = ssub.s32 %s24, 1
      %s30 = ssub.s32 %s24, 2
      %s37 = sadd.s32 1, %s32
      %p38 = scmp.ge.s32.totalorder %s37, 2
      %s39 = scalar_select %p38, 0, %s37
      %s40 = sadd.s32 1, %s31
      %s41 = scalar_select %p38, %s40, %s31
      %p42 = scmp.ge.s32.totalorder %s41, 1
      %s43 = scalar_select %p42, 0, %s41
      %s44 = ssub.s32 %s31, %s43
      %p45 = scmp.eq.s32.totalorder %s44, 0
      %s47 = sadd.s32 %s46, 1
      %s48 = scalar_select %p45, %s46, %s47
      %p51 = pneg %p45
      %p52 = scmp.eq.s32.totalorder %s24, 1
      %p53 = por %p51, %p52
      %p54 = scmp.ne.s32.totalorder %s46, %s49
      %p55 = scmp.eq.s32.totalorder %s24, 0
      %p56 = por %p54, %p55
      %p57 = scmp.ne.s32.totalorder %s46, %s49
      %p58 = scmp.eq.s32.totalorder %s29, 1
      %p59 = por %p57, %p58
      %p60 = scmp.ne.s32.totalorder %s49, %s50
      %p61 = scmp.eq.s32.totalorder %s29, 0
      %p62 = por %p60, %p61
      %p63 = scmp.ne.s32.totalorder %s49, %s50
      %p64 = scmp.eq.s32.totalorder %s30, 1
      %p65 = por %p63, %p64
      %p67 = scmp.ne.s32.totalorder %s50, %s66
      %p68 = scmp.eq.s32.totalorder %s30, 0
      %p69 = por %p67, %p68
      %s70 = ssub.s32 %s31, %s43
      %p71 = scmp.eq.s32.totalorder %s70, 0
      %s73 = sadd.s32 %s72, 1
      %s74 = scalar_select %p71, %s72, %s73
      %p77 = pneg %p71
      %p78 = scmp.eq.s32.totalorder %s24, 1
      %p79 = por %p77, %p78
      %p80 = scmp.ne.s32.totalorder %s72, %s75
      %p81 = scmp.eq.s32.totalorder %s24, 0
      %p82 = por %p80, %p81
      %p83 = scmp.ne.s32.totalorder %s72, %s75
      %p84 = scmp.eq.s32.totalorder %s29, 1
      %p85 = por %p83, %p84
      %p86 = scmp.ne.s32.totalorder %s75, %s76
      %p87 = scmp.eq.s32.totalorder %s29, 0
      %p88 = por %p86, %p87
      %p89 = scmp.ne.s32.totalorder %s75, %s76
      %p90 = scmp.eq.s32.totalorder %s30, 1
      %p91 = por %p89, %p90
      %p93 = scmp.ne.s32.totalorder %s76, %s92
      %p94 = scmp.eq.s32.totalorder %s30, 0
      %p95 = por %p93, %p94
      %s96 = ssub.s32 %s32, %s39
      %p97 = scmp.eq.s32.totalorder %s96, 0
      %s99 = sadd.s32 %s98, 1
      %s100 = scalar_select %p97, %s98, %s99
      %p103 = pneg %p97
      %p104 = scmp.eq.s32.totalorder %s24, 1
      %p105 = por %p103, %p104
      %p106 = scmp.ne.s32.totalorder %s98, %s101
      %p107 = scmp.eq.s32.totalorder %s24, 0
      %p108 = por %p106, %p107
      %p109 = scmp.ne.s32.totalorder %s98, %s101
      %p110 = scmp.eq.s32.totalorder %s29, 1
      %p111 = por %p109, %p110
      %p112 = scmp.ne.s32.totalorder %s101, %s102
      %p113 = scmp.eq.s32.totalorder %s29, 0
      %p114 = por %p112, %p113
      %p115 = scmp.ne.s32.totalorder %s101, %s102
      %p116 = scmp.eq.s32.totalorder %s30, 1
      %p117 = por %p115, %p116
      %p119 = scmp.ne.s32.totalorder %s102, %s118
      %p120 = scmp.eq.s32.totalorder %s30, 0
      %p121 = por %p119, %p120
      %s122 = ssub.s32 %s32, %s39
      %p123 = scmp.eq.s32.totalorder %s122, 0
      %s125 = sadd.s32 %s124, 1
      %s126 = scalar_select %p123, %s124, %s125
      %p129 = pneg %p123
      %p130 = scmp.eq.s32.totalorder %s24, 1
      %p131 = por %p129, %p130
      %p132 = scmp.ne.s32.totalorder %s124, %s127
      %p133 = scmp.eq.s32.totalorder %s24, 0
      %p134 = por %p132, %p133
      %p135 = scmp.ne.s32.totalorder %s124, %s127
      %p136 = scmp.eq.s32.totalorder %s29, 1
      %p137 = por %p135, %p136
      %p138 = scmp.ne.s32.totalorder %s127, %s128
      %p139 = scmp.eq.s32.totalorder %s29, 0
      %p140 = por %p138, %p139
      %p141 = scmp.ne.s32.totalorder %s127, %s128
      %p142 = scmp.eq.s32.totalorder %s30, 1
      %p143 = por %p141, %p142
      %p145 = scmp.ne.s32.totalorder %s128, %s144
      %p146 = scmp.eq.s32.totalorder %s30, 0
      %p147 = por %p145, %p146
      %s149 = sadd.s32 %s148, 1
      %p152 = scmp.eq.s32.totalorder %s24, 1
      %p153 = scmp.ne.s32.totalorder %s148, %s150
      %p154 = scmp.eq.s32.totalorder %s24, 0
      %p155 = por %p153, %p154
      %p156 = scmp.ne.s32.totalorder %s148, %s150
      %p157 = scmp.eq.s32.totalorder %s29, 1
      %p158 = por %p156, %p157
      %p159 = scmp.ne.s32.totalorder %s150, %s151
      %p160 = scmp.eq.s32.totalorder %s29, 0
      %p161 = por %p159, %p160
      %p162 = scmp.ne.s32.totalorder %s150, %s151
      %p163 = scmp.eq.s32.totalorder %s30, 1
      %p164 = por %p162, %p163
      %p166 = scmp.ne.s32.totalorder %s151, %s165
      %p167 = scmp.eq.s32.totalorder %s30, 0
      %p168 = por %p166, %p167
      %s170 = sadd.s32 %s169, 1
      %p173 = scmp.eq.s32.totalorder %s24, 1
      %p174 = scmp.ne.s32.totalorder %s169, %s171
      %p175 = scmp.eq.s32.totalorder %s24, 0
      %p176 = por %p174, %p175
      %p177 = scmp.ne.s32.totalorder %s169, %s171
      %p178 = scmp.eq.s32.totalorder %s29, 1
      %p179 = por %p177, %p178
      %p180 = scmp.ne.s32.totalorder %s171, %s172
      %p181 = scmp.eq.s32.totalorder %s29, 0
      %p182 = por %p180, %p181
      %p183 = scmp.ne.s32.totalorder %s171, %s172
      %p184 = scmp.eq.s32.totalorder %s30, 1
      %p185 = por %p183, %p184
      %p187 = scmp.ne.s32.totalorder %s172, %s186
      %p188 = scmp.eq.s32.totalorder %s30, 0
      %p189 = por %p187, %p188
      %s191 = sadd.s32 %s190, 1
      %p194 = scmp.eq.s32.totalorder %s24, 1
      %p195 = scmp.ne.s32.totalorder %s190, %s192
      %p196 = scmp.eq.s32.totalorder %s24, 0
      %p197 = por %p195, %p196
      %p198 = scmp.ne.s32.totalorder %s190, %s192
      %p199 = scmp.eq.s32.totalorder %s29, 1
      %p200 = por %p198, %p199
      %p201 = scmp.ne.s32.totalorder %s192, %s193
      %p202 = scmp.eq.s32.totalorder %s29, 0
      %p203 = por %p201, %p202
      %p204 = scmp.ne.s32.totalorder %s192, %s193
      %p205 = scmp.eq.s32.totalorder %s30, 1
      %p206 = por %p204, %p205
      %p208 = scmp.ne.s32.totalorder %s193, %s207
      %p209 = scmp.eq.s32.totalorder %s30, 0
      %p210 = por %p208, %p209
      %s212 = sadd.s32 %s211, 1
      %p215 = scmp.eq.s32.totalorder %s24, 1
      %p216 = scmp.ne.s32.totalorder %s211, %s213
      %p217 = scmp.eq.s32.totalorder %s24, 0
      %p218 = por %p216, %p217
      %p219 = scmp.ne.s32.totalorder %s211, %s213
      %p220 = scmp.eq.s32.totalorder %s29, 1
      %p221 = por %p219, %p220
      %p222 = scmp.ne.s32.totalorder %s213, %s214
      %p223 = scmp.eq.s32.totalorder %s29, 0
      %p224 = por %p222, %p223
      %p225 = scmp.ne.s32.totalorder %s213, %s214
      %p226 = scmp.eq.s32.totalorder %s30, 1
      %p227 = por %p225, %p226
      %p229 = scmp.ne.s32.totalorder %s214, %s228
      %p230 = scmp.eq.s32.totalorder %s30, 0
      %p231 = por %p229, %p230
      %s233 = sadd.s32 %s232, 1
      %p236 = scmp.eq.s32.totalorder %s24, 1
      %p237 = scmp.ne.s32.totalorder %s232, %s234
      %p238 = scmp.eq.s32.totalorder %s24, 0
      %p239 = por %p237, %p238
      %p240 = scmp.ne.s32.totalorder %s232, %s234
      %p241 = scmp.eq.s32.totalorder %s29, 1
      %p242 = por %p240, %p241
      %p243 = scmp.ne.s32.totalorder %s234, %s235
      %p244 = scmp.eq.s32.totalorder %s29, 0
      %p245 = por %p243, %p244
      %p246 = scmp.ne.s32.totalorder %s234, %s235
      %p247 = scmp.eq.s32.totalorder %s30, 1
      %p248 = por %p246, %p247
      %p250 = scmp.ne.s32.totalorder %s235, %s249
      %p251 = scmp.eq.s32.totalorder %s30, 0
      %p252 = por %p250, %p251
      %s254 = sadd.s32 %s253, 1
      %p257 = scmp.eq.s32.totalorder %s24, 1
      %p258 = scmp.ne.s32.totalorder %s253, %s255
      %p259 = scmp.eq.s32.totalorder %s24, 0
      %p260 = por %p258, %p259
      %p261 = scmp.ne.s32.totalorder %s253, %s255
      %p262 = scmp.eq.s32.totalorder %s29, 1
      %p263 = por %p261, %p262
      %p264 = scmp.ne.s32.totalorder %s255, %s256
      %p265 = scmp.eq.s32.totalorder %s29, 0
      %p266 = por %p264, %p265
      %p267 = scmp.ne.s32.totalorder %s255, %s256
      %p268 = scmp.eq.s32.totalorder %s30, 1
      %p269 = por %p267, %p268
      %p271 = scmp.ne.s32.totalorder %s256, %s270
      %p272 = scmp.eq.s32.totalorder %s30, 0
      %p273 = por %p271, %p272
      %s275 = sadd.s32 %s274, 1
      %p278 = scmp.eq.s32.totalorder %s24, 1
      %p279 = scmp.ne.s32.totalorder %s274, %s276
      %p280 = scmp.eq.s32.totalorder %s24, 0
      %p281 = por %p279, %p280
      %p282 = scmp.ne.s32.totalorder %s274, %s276
      %p283 = scmp.eq.s32.totalorder %s29, 1
      %p284 = por %p282, %p283
      %p285 = scmp.ne.s32.totalorder %s276, %s277
      %p286 = scmp.eq.s32.totalorder %s29, 0
      %p287 = por %p285, %p286
      %p288 = scmp.ne.s32.totalorder %s276, %s277
      %p289 = scmp.eq.s32.totalorder %s30, 1
      %p290 = por %p288, %p289
      %p292 = scmp.ne.s32.totalorder %s277, %s291
      %p293 = scmp.eq.s32.totalorder %s30, 0
      %p294 = por %p292, %p293
      %s296 = sadd.s32 %s295, 1
      %p299 = scmp.eq.s32.totalorder %s24, 1
      %p300 = scmp.ne.s32.totalorder %s295, %s297
      %p301 = scmp.eq.s32.totalorder %s24, 0
      %p302 = por %p300, %p301
      %p303 = scmp.ne.s32.totalorder %s295, %s297
      %p304 = scmp.eq.s32.totalorder %s29, 1
      %p305 = por %p303, %p304
      %p306 = scmp.ne.s32.totalorder %s297, %s298
      %p307 = scmp.eq.s32.totalorder %s29, 0
      %p308 = por %p306, %p307
      %p309 = scmp.ne.s32.totalorder %s297, %s298
      %p310 = scmp.eq.s32.totalorder %s30, 1
      %p311 = por %p309, %p310
      %p313 = scmp.ne.s32.totalorder %s298, %s312
      %p314 = scmp.eq.s32.totalorder %s30, 0
      %p315 = por %p313, %p314
      %s316 = ssub.s32 %s31, %s43
      %p317 = scmp.eq.s32.totalorder %s316, 0
      %s319 = sadd.s32 %s318, 1
      %s320 = scalar_select %p317, %s318, %s319
      %p323 = pneg %p317
      %p324 = scmp.eq.s32.totalorder %s24, 1
      %p325 = por %p323, %p324
      %p326 = scmp.ne.s32.totalorder %s318, %s321
      %p327 = scmp.eq.s32.totalorder %s24, 0
      %p328 = por %p326, %p327
      %p329 = scmp.ne.s32.totalorder %s318, %s321
      %p330 = scmp.eq.s32.totalorder %s29, 1
      %p331 = por %p329, %p330
      %p332 = scmp.ne.s32.totalorder %s321, %s322
      %p333 = scmp.eq.s32.totalorder %s29, 0
      %p334 = por %p332, %p333
      %p335 = scmp.ne.s32.totalorder %s321, %s322
      %p336 = scmp.eq.s32.totalorder %s30, 1
      %p337 = por %p335, %p336
      %p339 = scmp.ne.s32.totalorder %s322, %s338
      %p340 = scmp.eq.s32.totalorder %s30, 0
      %p341 = por %p339, %p340
      %p342 = scmp.le.s32.totalorder 1, %s24
      %p343 = scmp.lt.s32.totalorder %s24, 3
      %p344 = pnand %p342, %p343
      %p345 = pneg %p344
      // Predicated region
      $region9: #{image_adapter_forward.1} parent=5 // pred_check
        _
      $region10: #{image_adapter_forward.1} parent=5 // pred_check_branch
        %347 = sbr.rel (%p344) target = $region12
      $region11: #{image_adapter_forward.1} parent=5 // pred_region
        %s348 = ssub.s32 %s24, 1
        // Predicated region
        $region13: #{image_adapter_forward.1} parent=11 // pred_check
          %p349 = pneg %p62
        $region14: #{image_adapter_forward.1} parent=11 // pred_check_branch
          %351 = sbr.rel (%p349) target = $region16
        $region15: #{image_adapter_forward.1} parent=11 // pred_region
          %s352 = smul.u32 2, %s33
          %354 = vsyncadd [#allocation4], 0
          %s355 = smul.addr %s352, 8
          %s356 = scalar_lea.hbm %s0, %s355
          %s357 = sshll.u32 %s356, 4
          %s358 = int_to_ptr.hbm [resolvable:$true] %s357
          %s359 = sshll.u32 [#allocation3], 4
          %s360 = int_to_ptr.vmem [resolvable:$true] %s359
          %365 = dma.hbm_to_vmem [thread:$0]  %s358, 256, %s360, [#allocation4], 128, 128, 8
        $region16: #{image_adapter_forward.1} parent=11 // pred_fallthru
          _
        // Predicated region
        $region17: #{image_adapter_forward.1} parent=11 // pred_check
          %p366 = pneg %p88
        $region18: #{image_adapter_forward.1} parent=11 // pred_check_branch
          %368 = sbr.rel (%p366) target = $region20
        $region19: #{image_adapter_forward.1} parent=11 // pred_region
          %s369 = smul.u32 2, %s33
          %371 = vsyncadd [#allocation7], 0
          %s372 = smul.addr %s369, 8
          %s373 = scalar_lea.hbm %s1, %s372
          %s374 = sshll.u32 %s373, 4
          %s375 = int_to_ptr.hbm [resolvable:$true] %s374
          %s376 = sshll.u32 [#allocation6], 4
          %s377 = int_to_ptr.vmem [resolvable:$true] %s376
          %382 = dma.hbm_to_vmem [thread:$0]  %s375, 256, %s377, [#allocation7], 128, 128, 8
        $region20: #{image_adapter_forward.1} parent=11 // pred_fallthru
          _
        // Predicated region
        $region21: #{image_adapter_forward.1} parent=11 // pred_check
          %p383 = pneg %p161
        $region22: #{image_adapter_forward.1} parent=11 // pred_check_branch
          %385 = sbr.rel (%p383) target = $region24
        $region23: #{image_adapter_forward.1} parent=11 // pred_region
          %387 = vsyncadd [#allocation7], 0
          %s388 = sshll.u32 %s4, 4
          %s389 = int_to_ptr.hbm [resolvable:$true] %s388
          %s390 = sshll.u32 [#allocation9], 4
          %s391 = int_to_ptr.vmem [resolvable:$true] %s390
          %396 = dma.hbm_to_vmem [thread:$0]  %s389, 512, %s391, [#allocation7], 128, 128, 8
        $region24: #{image_adapter_forward.1} parent=11 // pred_fallthru
          _
        // Predicated region
        $region25: #{image_adapter_forward.1} parent=11 // pred_check
          %p397 = pneg %p182
        $region26: #{image_adapter_forward.1} parent=11 // pred_check_branch
          %399 = sbr.rel (%p397) target = $region28
        $region27: #{image_adapter_forward.1} parent=11 // pred_region
          _
        $region28: #{image_adapter_forward.1} parent=11 // pred_fallthru
          _
        // Predicated region
        $region29: #{image_adapter_forward.1} parent=11 // pred_check
          %p400 = pneg %p203
        $region30: #{image_adapter_forward.1} parent=11 // pred_check_branch
          %402 = sbr.rel (%p400) target = $region32
        $region31: #{image_adapter_forward.1} parent=11 // pred_region
          %404 = vsyncadd [#allocation11], 0
          %s405 = sshll.u32 %s6, 4
          %s406 = int_to_ptr.hbm [resolvable:$true] %s405
          %s407 = sshll.u32 [#allocation10], 4
          %s408 = int_to_ptr.vmem [resolvable:$true] %s407
          %413 = dma.hbm_to_vmem [thread:$0]  %s406, 512, %s408, [#allocation11], 128, 128, 8
        $region32: #{image_adapter_forward.1} parent=11 // pred_fallthru
          _
        // Predicated region
        $region33: #{image_adapter_forward.1} parent=11 // pred_check
          %p414 = pneg %p224
        $region34: #{image_adapter_forward.1} parent=11 // pred_check_branch
          %416 = sbr.rel (%p414) target = $region36
        $region35: #{image_adapter_forward.1} parent=11 // pred_region
          %418 = vsyncadd [#allocation11], 0
          %s420 = sshll.u32 %s7, 4
          %s421 = int_to_ptr.hbm [resolvable:$true] %s420
          %s422 = sshll.u32 [#allocation12], 4
          %s423 = int_to_ptr.vmem [resolvable:$true] %s422
          %425 = dma.hbm_to_vmem [thread:$0]  %s421, 16, %s423, [#allocation11]
        $region36: #{image_adapter_forward.1} parent=11 // pred_fallthru
          _
        // Predicated region
        $region37: #{image_adapter_forward.1} parent=11 // pred_check
          %p426 = pneg %p245
        $region38: #{image_adapter_forward.1} parent=11 // pred_check_branch
          %428 = sbr.rel (%p426) target = $region40
        $region39: #{image_adapter_forward.1} parent=11 // pred_region
          %430 = vsyncadd [#allocation14], 0
          %s431 = sshll.u32 %s8, 4
          %s432 = int_to_ptr.hbm [resolvable:$true] %s431
          %s433 = sshll.u32 [#allocation13], 4
          %s434 = int_to_ptr.vmem [resolvable:$true] %s433
          %439 = dma.hbm_to_vmem [thread:$0]  %s432, 512, %s434, [#allocation14], 128, 128, 8
        $region40: #{image_adapter_forward.1} parent=11 // pred_fallthru
          _
        // Predicated region
        $region41: #{image_adapter_forward.1} parent=11 // pred_check
          %p440 = pneg %p266
        $region42: #{image_adapter_forward.1} parent=11 // pred_check_branch
          %442 = sbr.rel (%p440) target = $region44
        $region43: #{image_adapter_forward.1} parent=11 // pred_region
          %444 = vsyncadd [#allocation14], 0
          %s446 = sshll.u32 %s9, 4
          %s447 = int_to_ptr.hbm [resolvable:$true] %s446
          %s448 = sshll.u32 [#allocation15], 4
          %s449 = int_to_ptr.vmem [resolvable:$true] %s448
          %451 = dma.hbm_to_vmem [thread:$0]  %s447, 16, %s449, [#allocation14]
        $region44: #{image_adapter_forward.1} parent=11 // pred_fallthru
          _
        // Predicated region
        $region45: #{image_adapter_forward.1} parent=11 // pred_check
          %p452 = pneg %p287
        $region46: #{image_adapter_forward.1} parent=11 // pred_check_branch
          %454 = sbr.rel (%p452) target = $region48
        $region47: #{image_adapter_forward.1} parent=11 // pred_region
          %456 = vsyncadd [#allocation17], 0
          %s457 = sshll.u32 %s10, 4
          %s458 = int_to_ptr.hbm [resolvable:$true] %s457
          %s459 = sshll.u32 [#allocation16], 4
          %s460 = int_to_ptr.vmem [resolvable:$true] %s459
          %465 = dma.hbm_to_vmem [thread:$0]  %s458, 512, %s460, [#allocation17], 128, 128, 8
        $region48: #{image_adapter_forward.1} parent=11 // pred_fallthru
          _
        // Predicated region
        $region49: #{image_adapter_forward.1} parent=11 // pred_check
          %p466 = pneg %p308
        $region50: #{image_adapter_forward.1} parent=11 // pred_check_branch
          %468 = sbr.rel (%p466) target = $region52
        $region51: #{image_adapter_forward.1} parent=11 // pred_region
          %470 = vsyncadd [#allocation17], 0
          %s472 = sshll.u32 %s11, 4
          %s473 = int_to_ptr.hbm [resolvable:$true] %s472
          %s474 = sshll.u32 [#allocation18], 4
          %s475 = int_to_ptr.vmem [resolvable:$true] %s474
          %477 = dma.hbm_to_vmem [thread:$0]  %s473, 16, %s475, [#allocation17]
        $region52: #{image_adapter_forward.1} parent=11 // pred_fallthru
          _
      $region12: #{image_adapter_forward.1} parent=5 // pred_fallthru
        _
      %p478 = scmp.lt.s32.totalorder %s24, 2
      // Predicated region
      $region53: #{image_adapter_forward.1} parent=5 // pred_check
        %p479 = pneg %p478
      $region54: #{image_adapter_forward.1} parent=5 // pred_check_branch
        %481 = sbr.rel (%p479) target = $region56
      $region55: #{image_adapter_forward.1} parent=5 // pred_region
        // Predicated region
        $region57: #{image_adapter_forward.1} parent=55 // pred_check
          %p482 = pneg %p108
        $region58: #{image_adapter_forward.1} parent=55 // pred_check_branch
          %484 = sbr.rel (%p482) target = $region60
        $region59: #{image_adapter_forward.1} parent=55 // pred_region
          %s485 = sand.u32 %s24, 1
          %s486 = scalar_lea.sflag [#allocation4], %s485
          %s487 = sand.u32 %s98, 1
          %s488 = smul.addr %s487, 32
          %s489 = scalar_lea.vmem [#allocation8], %s488
          %491 = vsyncadd %s486, 0
          %s492 = smul.addr %s32, 4
          %s493 = smul.addr %s492, 8
          %s494 = scalar_lea.hbm %s2, %s493
          %s495 = sshll.u32 %s494, 4
          %s496 = int_to_ptr.hbm [resolvable:$true] %s495
          %s497 = sshll.u32 %s489, 4
          %s498 = int_to_ptr.vmem [resolvable:$true] %s497
          %503 = dma.hbm_to_vmem [thread:$0]  %s496, 512, %s498, %s486, 128, 128, 8
        $region60: #{image_adapter_forward.1} parent=55 // pred_fallthru
          _
        // Predicated region
        $region61: #{image_adapter_forward.1} parent=55 // pred_check
          %p504 = pneg %p134
        $region62: #{image_adapter_forward.1} parent=55 // pred_check_branch
          %506 = sbr.rel (%p504) target = $region64
        $region63: #{image_adapter_forward.1} parent=55 // pred_region
          %p507 = scmp.lt.s32.totalorder %s32, 1
          %s508 = scalar_select %p507, %s32, 1
          %s509 = scalar_lea.vmem %s3, %s508
        $region64: #{image_adapter_forward.1} parent=55 // pred_fallthru
          _
      $region56: #{image_adapter_forward.1} parent=5 // pred_fallthru
        _
      %p510 = scmp.le.s32.totalorder 1, %s24
      %p511 = scmp.lt.s32.totalorder %s24, 3
      %p512 = pnand %p510, %p511
      %p513 = pneg %p512
      // Predicated region
      $region65: #{image_adapter_forward.1} parent=5 // pred_check
        _
      $region66: #{image_adapter_forward.1} parent=5 // pred_check_branch
        %515 = sbr.rel (%p512) target = $region68
      $region67: #{image_adapter_forward.1} parent=5 // pred_region
        %s516 = ssub.s32 %s24, 1
        // Predicated region
        $region69: #{image_adapter_forward.1} parent=67 // pred_check
          %p517 = pneg %p62
        $region70: #{image_adapter_forward.1} parent=67 // pred_check_branch
          %519 = sbr.rel (%p517) target = $region72
        $region71: #{image_adapter_forward.1} parent=67 // pred_region
          %521 = dma.done [#allocation4], 256
        $region72: #{image_adapter_forward.1} parent=67 // pred_fallthru
          _
        // Predicated region
        $region73: #{image_adapter_forward.1} parent=67 // pred_check
          %p522 = pneg %p88
        $region74: #{image_adapter_forward.1} parent=67 // pred_check_branch
          %524 = sbr.rel (%p522) target = $region76
        $region75: #{image_adapter_forward.1} parent=67 // pred_region
          %526 = dma.done [#allocation7], 256
        $region76: #{image_adapter_forward.1} parent=67 // pred_fallthru
          _
        %s527 = sand.u32 %s29, 1
        %s528 = scalar_lea.sflag [#allocation4], %s527
        %s529 = sand.u32 %s101, 1
        %s530 = smul.addr %s529, 32
        %s531 = scalar_lea.vmem [#allocation8], %s530
        // Predicated region
        $region77: #{image_adapter_forward.1} parent=67 // pred_check
          %p532 = pneg %p114
        $region78: #{image_adapter_forward.1} parent=67 // pred_check_branch
          %534 = sbr.rel (%p532) target = $region80
        $region79: #{image_adapter_forward.1} parent=67 // pred_region
          %536 = dma.done %s528, 512
        $region80: #{image_adapter_forward.1} parent=67 // pred_fallthru
          _
        // Predicated region
        $region81: #{image_adapter_forward.1} parent=67 // pred_check
          %p537 = pneg %p161
        $region82: #{image_adapter_forward.1} parent=67 // pred_check_branch
          %539 = sbr.rel (%p537) target = $region84
        $region83: #{image_adapter_forward.1} parent=67 // pred_region
          %541 = dma.done [#allocation7], 512
        $region84: #{image_adapter_forward.1} parent=67 // pred_fallthru
          _
        // Predicated region
        $region85: #{image_adapter_forward.1} parent=67 // pred_check
          %p542 = pneg %p203
        $region86: #{image_adapter_forward.1} parent=67 // pred_check_branch
          %544 = sbr.rel (%p542) target = $region88
        $region87: #{image_adapter_forward.1} parent=67 // pred_region
          %546 = dma.done [#allocation11], 512
        $region88: #{image_adapter_forward.1} parent=67 // pred_fallthru
          _
        // Predicated region
        $region89: #{image_adapter_forward.1} parent=67 // pred_check
          %p547 = pneg %p224
        $region90: #{image_adapter_forward.1} parent=67 // pred_check_branch
          %549 = sbr.rel (%p547) target = $region92
        $region91: #{image_adapter_forward.1} parent=67 // pred_region
          %551 = dma.done [#allocation11], 16
        $region92: #{image_adapter_forward.1} parent=67 // pred_fallthru
          _
        // Predicated region
        $region93: #{image_adapter_forward.1} parent=67 // pred_check
          %p552 = pneg %p245
        $region94: #{image_adapter_forward.1} parent=67 // pred_check_branch
          %554 = sbr.rel (%p552) target = $region96
        $region95: #{image_adapter_forward.1} parent=67 // pred_region
          %556 = dma.done [#allocation14], 512
        $region96: #{image_adapter_forward.1} parent=67 // pred_fallthru
          _
        // Predicated region
        $region97: #{image_adapter_forward.1} parent=67 // pred_check
          %p557 = pneg %p266
        $region98: #{image_adapter_forward.1} parent=67 // pred_check_branch
          %559 = sbr.rel (%p557) target = $region100
        $region99: #{image_adapter_forward.1} parent=67 // pred_region
          %561 = dma.done [#allocation14], 16
        $region100: #{image_adapter_forward.1} parent=67 // pred_fallthru
          _
        // Predicated region
        $region101: #{image_adapter_forward.1} parent=67 // pred_check
          %p562 = pneg %p287
        $region102: #{image_adapter_forward.1} parent=67 // pred_check_branch
          %564 = sbr.rel (%p562) target = $region104
        $region103: #{image_adapter_forward.1} parent=67 // pred_region
          %566 = dma.done [#allocation17], 512
        $region104: #{image_adapter_forward.1} parent=67 // pred_fallthru
          _
        // Predicated region
        $region105: #{image_adapter_forward.1} parent=67 // pred_check
          %p567 = pneg %p308
        $region106: #{image_adapter_forward.1} parent=67 // pred_check_branch
          %569 = sbr.rel (%p567) target = $region108
        $region107: #{image_adapter_forward.1} parent=67 // pred_region
          %571 = dma.done [#allocation17], 16
        $region108: #{image_adapter_forward.1} parent=67 // pred_fallthru
          _
        %p572 = pneg %p62
        %p573 = pneg %p59
        %p574 = pneg %p88
        %p575 = pneg %p85
        %s576 = sand.u32 %s29, 1
        %s577 = scalar_lea.sflag [#allocation4], %s576
        %s578 = sand.u32 %s101, 1
        %s579 = smul.addr %s578, 32
        %s580 = scalar_lea.vmem [#allocation8], %s579
        %p581 = pneg %p114
        %p582 = pneg %p111
        %p583 = scmp.lt.s32.totalorder %s34, 1
        %s584 = scalar_select %p583, %s34, 1
        %s585 = scalar_lea.vmem %s3, %s584
        %p586 = pneg %p140
        %p587 = pneg %p137
        %p588 = pneg %p161
        %p589 = pneg %p158
        %p590 = pneg %p182
        %p591 = pneg %p179
        %p592 = pneg %p203
        %p593 = pneg %p200
        %p594 = pneg %p224
        %p595 = pneg %p221
        %p596 = pneg %p245
        %p597 = pneg %p242
        %p598 = pneg %p266
        %p599 = pneg %p263
        %p600 = pneg %p287
        %p601 = pneg %p284
        %p602 = pneg %p308
        %p603 = pneg %p305
        %p604 = pneg %p334
        %p605 = pneg %p331
        %s606 = smul.u32 2, %s33
        %s607 = smul.u32 2, %s33
        %p608 = scmp.lt.s32.totalorder %s34, 1
        %s609 = scalar_select %p608, %s34, 1
        %s610 = scalar_lea.vmem %s3, %s609
        %s611 = smul.u32 2, %s33
        %p612 = scmp.eq.s32.totalorder %s34, 0
        // Predicated region
        $region109: #{image_adapter_forward.1} parent=67 // pred_check
          %p613 = pneg %p612
        $region110: #{image_adapter_forward.1} parent=67 // pred_check_branch
          %615 = sbr.rel (%p613) target = $region112
        $region111: #{image_adapter_forward.1} parent=67 // pred_region
          %v616 = vld [vmem:[#allocation3] sm:$0xff]
          %v617 = vld [vmem:[#allocation3 + $0x8] sm:$0xff]
          %vm618 = vcmask 261120
          %619 = vst.msk [vmem:[#allocation2] sm:$0xff] %vm618, %v616
          %620 = vst.msk [vmem:[#allocation2 + $0x8] sm:$0xff] %vm618, %v617
        $region112: #{image_adapter_forward.1} parent=67 // pred_fallthru
          _
        %v621 = vld [vmem:[#allocation2] sm:$0xff]
        %v622 = vld [vmem:[#allocation2 + $0x8] sm:$0xff]
        %v623 = vld [vmem:[%s531] sm:$0xff]
        %v624 = vld [vmem:[%s531 + $0x8] sm:$0xff]
        %v625 = vld [vmem:[%s531 + $0x10] sm:$0xff]
        %v626 = vld [vmem:[%s531 + $0x18] sm:$0xff]
        %v627 = vld [vmem:[%s610] sm:$0x1]
        %v629 = vperm.slane %v627, 0
        %vm631 = vcmask 261120
        %v633 = vsel %vm631, %v621, 0
        %v636 = vsel %vm631, %v622, 0
        %638 = vmatpush.msra.mxu0 0.0
        %639 = vmatpush.msra.mxu0 0.0
        %640 = vmatpush.msra.mxu0 0.0
        %641 = vmatpush.msra.mxu0 0.0
        %642 = vmatpush.msra.mxu0 0.0
        %643 = vmatpush.msra.mxu0 0.0
        %644 = vmatpush.msra.mxu0 0.0
        %645 = vmatpush.msra.mxu0 0.0
        %646 = vmatpush.msra.mxu0 0.0
        %647 = vmatpush.msra.mxu0 0.0
        %648 = vmatpush.msra.mxu0 0.0
        %649 = vmatpush.msra.mxu0 0.0
        %650 = vmatpush.msra.mxu0 %v626
        %651 = vmatpush.msra.mxu0 %v625
        %652 = vmatpush.msra.mxu0 %v624
        %653 = vmatpush.msra.mxu0 %v623
        %654 = vmatmul.f32.gmra.mxu0 %v633
        %v655 = vpop.f32.mrf.mxu0
        %v656 = vadd.f32 %v629, %v655
        %657 = vmatmul.f32.gmra.mxu0 %v636
        %v658 = vpop.f32.mrf.mxu0
        %v659 = vadd.f32 %v629, %v658
        %660 = vdwg.mxu0
        %662 = vrot.lane.b32.xlu0 %v656, 96
        %v663 = vpop.permute.xlu0 %662
        %v664 = vsel %vm631, %v656, 0
        %v666 = vsel %vm631, %v663, 0
        %668 = vmatpush.xpose.msra.mxu0 0.0
        %669 = vmatpush.xpose.msra.mxu0 0.0
        %670 = vmatpush.xpose.msra.mxu0 0.0
        %671 = vmatpush.xpose.msra.mxu0 0.0
        %672 = vmatpush.xpose.msra.mxu0 0.0
        %673 = vmatpush.xpose.msra.mxu0 0.0
        %674 = vmatpush.xpose.msra.mxu0 0.0
        %675 = vmatpush.xpose.msra.mxu0 0.0
        %676 = vmatpush.xpose.msra.mxu0 0.0
        %677 = vmatpush.xpose.msra.mxu0 0.0
        %678 = vmatpush.xpose.msra.mxu0 0.0
        %679 = vmatpush.xpose.msra.mxu0 0.0
        %680 = vmatpush.xpose.msra.mxu0 0.0
        %681 = vmatpush.xpose.msra.mxu0 0.0
        %682 = vmatpush.xpose.msra.mxu0 0.0
        %683 = vmatpush.xpose.msra.mxu0 %v666
        %684 = vmatmul.f32.gmra.mxu0 %v664
        %v685 = vpop.f32.mrf.mxu0
        %v686 = vadd.f32 0.0, %v685
        %687 = vdwg.mxu0
        %689 = vrot.lane.b32.xlu0 %v659, 96
        %v690 = vpop.permute.xlu0 %689
        %v691 = vsel %vm631, %v659, 0
        %v693 = vsel %vm631, %v690, 0
        %695 = vmatpush.xpose.msra.mxu0 0.0
        %696 = vmatpush.xpose.msra.mxu0 0.0
        %697 = vmatpush.xpose.msra.mxu0 0.0
        %698 = vmatpush.xpose.msra.mxu0 0.0
        %699 = vmatpush.xpose.msra.mxu0 0.0
        %700 = vmatpush.xpose.msra.mxu0 0.0
        %701 = vmatpush.xpose.msra.mxu0 0.0
        %702 = vmatpush.xpose.msra.mxu0 0.0
        %703 = vmatpush.xpose.msra.mxu0 0.0
        %704 = vmatpush.xpose.msra.mxu0 0.0
        %705 = vmatpush.xpose.msra.mxu0 0.0
        %706 = vmatpush.xpose.msra.mxu0 0.0
        %707 = vmatpush.xpose.msra.mxu0 0.0
        %708 = vmatpush.xpose.msra.mxu0 0.0
        %709 = vmatpush.xpose.msra.mxu0 0.0
        %710 = vmatpush.xpose.msra.mxu0 %v693
        %711 = vmatmul.f32.gmra.mxu0 %v691
        %v712 = vpop.f32.mrf.mxu0
        %v713 = vadd.f32 0.0, %v712
        %714 = vdwg.mxu0
        %vm715 = vcmask 64512
        %v716 = vsel %vm715, %v686, -inf
        %717 = vmax.xlane.f32.xlu0 %v716
        %v718 = vpop.xlane.xlu0 %717
        %v719 = vsel %vm715, %v713, -inf
        %720 = vmax.xlane.f32.xlu0 %v719
        %v721 = vpop.xlane.xlu0 %720
        %v722 = vsub.f32 %v686, %v718
        %v723 = vsub.f32 %v713, %v721
        %v724 = vmul.f32 %v722, 1.442695
        %v725 = vpow.pop %v724
        %v726 = vmul.f32 %v723, 1.442695
        %v727 = vpow.pop %v726
        %v728 = vsel %vm715, %v725, 0.0
        %729 = vadd.xlane.f32.xlu0 %v728
        %v730 = vpop.xlane.xlu0 %729
        %v731 = vsel %vm715, %v727, 0.0
        %732 = vadd.xlane.f32.xlu0 %v731
        %v733 = vpop.xlane.xlu0 %732
        %v734 = vrcp.pop %v730
        %v735 = vmul.f32 %v730, %v734
        %v736 = vsub.f32 1.0, %v735
        %v737 = vmul.f32 %v734, %v736
        %v738 = vadd.f32 %v734, %v737
        %vm739 = vweird.f32 %v730
        %vm740 = vweird.f32 %v734
        %vm741 = vmor %vm739, %vm740
        %v742 = vsel %vm741, %v734, %v738
        %v743 = vand.u32 2147483647, %v730
        %vm744 = vcmp.eq.f32.partialorder %v743, 8.507059e+37
        %v745 = vand.u32 %v730, 2147483648
        %v746 = vor.u32 1.1754944e-38, %v745
        %v747 = vsel %vm744, %v746, %v742
        %v748 = vrcp.pop %v733
        %v749 = vmul.f32 %v733, %v748
        %v750 = vsub.f32 1.0, %v749
        %v751 = vmul.f32 %v748, %v750
        %v752 = vadd.f32 %v748, %v751
        %vm753 = vweird.f32 %v733
        %vm754 = vweird.f32 %v748
        %vm755 = vmor %vm753, %vm754
        %v756 = vsel %vm755, %v748, %v752
        %v757 = vand.u32 2147483647, %v733
        %vm758 = vcmp.eq.f32.partialorder %v757, 8.507059e+37
        %v759 = vand.u32 %v733, 2147483648
        %v760 = vor.u32 1.1754944e-38, %v759
        %v761 = vsel %vm758, %v760, %v756
        %v762 = vmul.f32 %v725, %v747
        %v763 = vmul.f32 %v727, %v761
        %764 = vrot.lane.b32.xlu0 %v656, 64
        %v765 = vpop.permute.xlu0 %764
        %v768 = vsel %vm715, %v762, 0
        %770 = vmatpush.msra.mxu0 0.0
        %771 = vmatpush.msra.mxu0 0.0
        %772 = vmatpush.msra.mxu0 0.0
        %773 = vmatpush.msra.mxu0 0.0
        %774 = vmatpush.msra.mxu0 0.0
        %775 = vmatpush.msra.mxu0 0.0
        %776 = vmatpush.msra.mxu0 0.0
        %777 = vmatpush.msra.mxu0 0.0
        %778 = vmatpush.msra.mxu0 0.0
        %779 = vmatpush.msra.mxu0 0.0
        %780 = vmatpush.msra.mxu0 0.0
        %781 = vmatpush.msra.mxu0 0.0
        %782 = vmatpush.msra.mxu0 0.0
        %783 = vmatpush.msra.mxu0 0.0
        %784 = vmatpush.msra.mxu0 0.0
        %785 = vmatpush.msra.mxu0 %v765
        %786 = vmatmul.f32.gmra.mxu0 %v768
        %v787 = vpop.f32.mrf.mxu0
        %v788 = vadd.f32 0.0, %v787
        %789 = vdwg.mxu0
        %790 = vrot.lane.b32.xlu0 %v659, 64
        %v791 = vpop.permute.xlu0 %790
        %v794 = vsel %vm715, %v763, 0
        %796 = vmatpush.msra.mxu0 0.0
        %797 = vmatpush.msra.mxu0 0.0
        %798 = vmatpush.msra.mxu0 0.0
        %799 = vmatpush.msra.mxu0 0.0
        %800 = vmatpush.msra.mxu0 0.0
        %801 = vmatpush.msra.mxu0 0.0
        %802 = vmatpush.msra.mxu0 0.0
        %803 = vmatpush.msra.mxu0 0.0
        %804 = vmatpush.msra.mxu0 0.0
        %805 = vmatpush.msra.mxu0 0.0
        %806 = vmatpush.msra.mxu0 0.0
        %807 = vmatpush.msra.mxu0 0.0
        %808 = vmatpush.msra.mxu0 0.0
        %809 = vmatpush.msra.mxu0 0.0
        %810 = vmatpush.msra.mxu0 0.0
        %811 = vmatpush.msra.mxu0 %v791
        %812 = vmatmul.f32.gmra.mxu0 %v794
        %v813 = vpop.f32.mrf.mxu0
        %v814 = vadd.f32 0.0, %v813
        %815 = vdwg.mxu0
        %v816 = vadd.f32 %v621, %v788
        %v817 = vadd.f32 %v622, %v814
        %818 = vst.msk [vmem:[#allocation2] sm:$0xff] %vm631, %v816
        %819 = vst.msk [vmem:[#allocation2 + $0x8] sm:$0xff] %vm631, %v817
        %p820 = scmp.eq.s32.totalorder %s34, 1
        // Predicated region
        $region113: #{image_adapter_forward.1} parent=67 // pred_check
          %p821 = pneg %p820
        $region114: #{image_adapter_forward.1} parent=67 // pred_check_branch
          %823 = sbr.rel (%p821) target = $region116
        $region115: #{image_adapter_forward.1} parent=67 // pred_region
          %v824 = vld [vmem:[#allocation6] sm:$0xff]
          %v825 = vld [vmem:[#allocation6 + $0x8] sm:$0xff]
          %v826 = vld [vmem:[#allocation9] sm:$0xff]
          %v827 = vld [vmem:[#allocation9 + $0x8] sm:$0xff]
          %v828 = vld [vmem:[#allocation9 + $0x10] sm:$0xff]
          %v829 = vld [vmem:[#allocation9 + $0x18] sm:$0xff]
          %v830 = vld [vmem:[%s5] sm:$0x1]
          %v832 = vperm.slane %v830, 0
          %v835 = vsel %vm631, %v816, 0
          %v838 = vsel %vm631, %v817, 0
          %840 = vmatpush.msra.mxu0 0.0
          %841 = vmatpush.msra.mxu0 0.0
          %842 = vmatpush.msra.mxu0 0.0
          %843 = vmatpush.msra.mxu0 0.0
          %844 = vmatpush.msra.mxu0 0.0
          %845 = vmatpush.msra.mxu0 0.0
          %846 = vmatpush.msra.mxu0 0.0
          %847 = vmatpush.msra.mxu0 0.0
          %848 = vmatpush.msra.mxu0 0.0
          %849 = vmatpush.msra.mxu0 0.0
          %850 = vmatpush.msra.mxu0 0.0
          %851 = vmatpush.msra.mxu0 0.0
          %852 = vmatpush.msra.mxu0 %v829
          %853 = vmatpush.msra.mxu0 %v828
          %854 = vmatpush.msra.mxu0 %v827
          %855 = vmatpush.msra.mxu0 %v826
          %856 = vmatmul.f32.gmra.mxu0 %v835
          %v857 = vpop.f32.mrf.mxu0
          %v858 = vadd.f32 %v832, %v857
          %859 = vmatmul.f32.gmra.mxu0 %v838
          %v860 = vpop.f32.mrf.mxu0
          %v861 = vadd.f32 %v832, %v860
          %862 = vdwg.mxu0
          %v863 = vld [vmem:[#allocation10] sm:$0xff]
          %v864 = vld [vmem:[#allocation10 + $0x8] sm:$0xff]
          %v865 = vld [vmem:[#allocation10 + $0x10] sm:$0xff]
          %v866 = vld [vmem:[#allocation10 + $0x18] sm:$0xff]
          %v867 = vld [vmem:[#allocation12] sm:$0x1]
          %v869 = vperm.slane %v867, 0
          %v872 = vsel %vm631, %v824, 0
          %v875 = vsel %vm631, %v825, 0
          %877 = vmatpush.msra.mxu0 0.0
          %878 = vmatpush.msra.mxu0 0.0
          %879 = vmatpush.msra.mxu0 0.0
          %880 = vmatpush.msra.mxu0 0.0
          %881 = vmatpush.msra.mxu0 0.0
          %882 = vmatpush.msra.mxu0 0.0
          %883 = vmatpush.msra.mxu0 0.0
          %884 = vmatpush.msra.mxu0 0.0
          %885 = vmatpush.msra.mxu0 0.0
          %886 = vmatpush.msra.mxu0 0.0
          %887 = vmatpush.msra.mxu0 0.0
          %888 = vmatpush.msra.mxu0 0.0
          %889 = vmatpush.msra.mxu0 %v866
          %890 = vmatpush.msra.mxu0 %v865
          %891 = vmatpush.msra.mxu0 %v864
          %892 = vmatpush.msra.mxu0 %v863
          %893 = vmatmul.f32.gmra.mxu0 %v872
          %v894 = vpop.f32.mrf.mxu0
          %v895 = vadd.f32 %v869, %v894
          %896 = vmatmul.f32.gmra.mxu0 %v875
          %v897 = vpop.f32.mrf.mxu0
          %v898 = vadd.f32 %v869, %v897
          %899 = vdwg.mxu0
          %v901 = vsel %vm631, %v858, 0
          %v904 = vsel %vm631, %v895, 0
          %906 = vmatpush.xpose.msra.mxu0 0.0
          %907 = vmatpush.xpose.msra.mxu0 0.0
          %908 = vmatpush.xpose.msra.mxu0 0.0
          %909 = vmatpush.xpose.msra.mxu0 0.0
          %910 = vmatpush.xpose.msra.mxu0 0.0
          %911 = vmatpush.xpose.msra.mxu0 0.0
          %912 = vmatpush.xpose.msra.mxu0 0.0
          %913 = vmatpush.xpose.msra.mxu0 0.0
          %914 = vmatpush.xpose.msra.mxu0 0.0
          %915 = vmatpush.xpose.msra.mxu0 0.0
          %916 = vmatpush.xpose.msra.mxu0 0.0
          %917 = vmatpush.xpose.msra.mxu0 0.0
          %918 = vmatpush.xpose.msra.mxu0 0.0
          %919 = vmatpush.xpose.msra.mxu0 0.0
          %920 = vmatpush.xpose.msra.mxu0 0.0
          %921 = vmatpush.xpose.msra.mxu0 %v904
          %922 = vmatmul.f32.gmra.mxu0 %v901
          %v923 = vpop.f32.mrf.mxu0
          %v924 = vadd.f32 0.0, %v923
          %925 = vdwg.mxu0
          %v927 = vsel %vm631, %v861, 0
          %v930 = vsel %vm631, %v898, 0
          %932 = vmatpush.xpose.msra.mxu0 0.0
          %933 = vmatpush.xpose.msra.mxu0 0.0
          %934 = vmatpush.xpose.msra.mxu0 0.0
          %935 = vmatpush.xpose.msra.mxu0 0.0
          %936 = vmatpush.xpose.msra.mxu0 0.0
          %937 = vmatpush.xpose.msra.mxu0 0.0
          %938 = vmatpush.xpose.msra.mxu0 0.0
          %939 = vmatpush.xpose.msra.mxu0 0.0
          %940 = vmatpush.xpose.msra.mxu0 0.0
          %941 = vmatpush.xpose.msra.mxu0 0.0
          %942 = vmatpush.xpose.msra.mxu0 0.0
          %943 = vmatpush.xpose.msra.mxu0 0.0
          %944 = vmatpush.xpose.msra.mxu0 0.0
          %945 = vmatpush.xpose.msra.mxu0 0.0
          %946 = vmatpush.xpose.msra.mxu0 0.0
          %947 = vmatpush.xpose.msra.mxu0 %v930
          %948 = vmatmul.f32.gmra.mxu0 %v927
          %v949 = vpop.f32.mrf.mxu0
          %v950 = vadd.f32 0.0, %v949
          %951 = vdwg.mxu0
          %v952 = vsel %vm715, %v924, -inf
          %953 = vmax.xlane.f32.xlu0 %v952
          %v954 = vpop.xlane.xlu0 %953
          %v955 = vsel %vm715, %v950, -inf
          %956 = vmax.xlane.f32.xlu0 %v955
          %v957 = vpop.xlane.xlu0 %956
          %v958 = vsub.f32 %v924, %v954
          %v959 = vsub.f32 %v950, %v957
          %v960 = vmul.f32 %v958, 1.442695
          %v961 = vpow.pop %v960
          %v962 = vmul.f32 %v959, 1.442695
          %v963 = vpow.pop %v962
          %v964 = vsel %vm715, %v961, 0.0
          %965 = vadd.xlane.f32.xlu0 %v964
          %v966 = vpop.xlane.xlu0 %965
          %v967 = vsel %vm715, %v963, 0.0
          %968 = vadd.xlane.f32.xlu0 %v967
          %v969 = vpop.xlane.xlu0 %968
          %v970 = vrcp.pop %v966
          %v971 = vmul.f32 %v966, %v970
          %v972 = vsub.f32 1.0, %v971
          %v973 = vmul.f32 %v970, %v972
          %v974 = vadd.f32 %v970, %v973
          %vm975 = vweird.f32 %v966
          %vm976 = vweird.f32 %v970
          %vm977 = vmor %vm975, %vm976
          %v978 = vsel %vm977, %v970, %v974
          %v979 = vand.u32 2147483647, %v966
          %vm980 = vcmp.eq.f32.partialorder %v979, 8.507059e+37
          %v981 = vand.u32 %v966, 2147483648
          %v982 = vor.u32 1.1754944e-38, %v981
          %v983 = vsel %vm980, %v982, %v978
          %v984 = vrcp.pop %v969
          %v985 = vmul.f32 %v969, %v984
          %v986 = vsub.f32 1.0, %v985
          %v987 = vmul.f32 %v984, %v986
          %v988 = vadd.f32 %v984, %v987
          %vm989 = vweird.f32 %v969
          %vm990 = vweird.f32 %v984
          %vm991 = vmor %vm989, %vm990
          %v992 = vsel %vm991, %v984, %v988
          %v993 = vand.u32 2147483647, %v969
          %vm994 = vcmp.eq.f32.partialorder %v993, 8.507059e+37
          %v995 = vand.u32 %v969, 2147483648
          %v996 = vor.u32 1.1754944e-38, %v995
          %v997 = vsel %vm994, %v996, %v992
          %v998 = vmul.f32 %v961, %v983
          %v999 = vmul.f32 %v963, %v997
          %1000 = vrot.lane.b32.xlu0 %v895, 96
          %v1001 = vpop.permute.xlu0 %1000
          %v1004 = vsel %vm715, %v998, 0
          %1006 = vmatpush.msra.mxu0 0.0
          %1007 = vmatpush.msra.mxu0 0.0
          %1008 = vmatpush.msra.mxu0 0.0
          %1009 = vmatpush.msra.mxu0 0.0
          %1010 = vmatpush.msra.mxu0 0.0
          %1011 = vmatpush.msra.mxu0 0.0
          %1012 = vmatpush.msra.mxu0 0.0
          %1013 = vmatpush.msra.mxu0 0.0
          %1014 = vmatpush.msra.mxu0 0.0
          %1015 = vmatpush.msra.mxu0 0.0
          %1016 = vmatpush.msra.mxu0 0.0
          %1017 = vmatpush.msra.mxu0 0.0
          %1018 = vmatpush.msra.mxu0 0.0
          %1019 = vmatpush.msra.mxu0 0.0
          %1020 = vmatpush.msra.mxu0 0.0
          %1021 = vmatpush.msra.mxu0 %v1001
          %1022 = vmatmul.f32.gmra.mxu0 %v1004
          %v1023 = vpop.f32.mrf.mxu0
          %v1024 = vadd.f32 0.0, %v1023
          %1025 = vdwg.mxu0
          %1026 = vrot.lane.b32.xlu0 %v898, 96
          %v1027 = vpop.permute.xlu0 %1026
          %v1030 = vsel %vm715, %v999, 0
          %1032 = vmatpush.msra.mxu0 0.0
          %1033 = vmatpush.msra.mxu0 0.0
          %1034 = vmatpush.msra.mxu0 0.0
          %1035 = vmatpush.msra.mxu0 0.0
          %1036 = vmatpush.msra.mxu0 0.0
          %1037 = vmatpush.msra.mxu0 0.0
          %1038 = vmatpush.msra.mxu0 0.0
          %1039 = vmatpush.msra.mxu0 0.0
          %1040 = vmatpush.msra.mxu0 0.0
          %1041 = vmatpush.msra.mxu0 0.0
          %1042 = vmatpush.msra.mxu0 0.0
          %1043 = vmatpush.msra.mxu0 0.0
          %1044 = vmatpush.msra.mxu0 0.0
          %1045 = vmatpush.msra.mxu0 0.0
          %1046 = vmatpush.msra.mxu0 0.0
          %1047 = vmatpush.msra.mxu0 %v1027
          %1048 = vmatmul.f32.gmra.mxu0 %v1030
          %v1049 = vpop.f32.mrf.mxu0
          %v1050 = vadd.f32 0.0, %v1049
          %1051 = vdwg.mxu0
          %v1052 = vadd.f32 %v816, %v1024
          %v1053 = vadd.f32 %v817, %v1050
          %v1054 = vld [vmem:[#allocation13] sm:$0xff]
          %v1055 = vld [vmem:[#allocation13 + $0x8] sm:$0xff]
          %v1056 = vld [vmem:[#allocation13 + $0x10] sm:$0xff]
          %v1057 = vld [vmem:[#allocation13 + $0x18] sm:$0xff]
          %v1058 = vld [vmem:[#allocation15] sm:$0x1]
          %v1060 = vperm.slane %v1058, 0
          %v1063 = vsel %vm631, %v1052, 0
          %v1066 = vsel %vm631, %v1053, 0
          %1068 = vmatpush.msra.mxu0 0.0
          %1069 = vmatpush.msra.mxu0 0.0
          %1070 = vmatpush.msra.mxu0 0.0
          %1071 = vmatpush.msra.mxu0 0.0
          %1072 = vmatpush.msra.mxu0 0.0
          %1073 = vmatpush.msra.mxu0 0.0
          %1074 = vmatpush.msra.mxu0 0.0
          %1075 = vmatpush.msra.mxu0 0.0
          %1076 = vmatpush.msra.mxu0 0.0
          %1077 = vmatpush.msra.mxu0 0.0
          %1078 = vmatpush.msra.mxu0 0.0
          %1079 = vmatpush.msra.mxu0 0.0
          %1080 = vmatpush.msra.mxu0 %v1057
          %1081 = vmatpush.msra.mxu0 %v1056
          %1082 = vmatpush.msra.mxu0 %v1055
          %1083 = vmatpush.msra.mxu0 %v1054
          %1084 = vmatmul.f32.gmra.mxu0 %v1063
          %v1085 = vpop.f32.mrf.mxu0
          %v1086 = vadd.f32 %v1060, %v1085
          %1087 = vmatmul.f32.gmra.mxu0 %v1066
          %v1088 = vpop.f32.mrf.mxu0
          %v1089 = vadd.f32 %v1060, %v1088
          %1090 = vdwg.mxu0
          %v1091 = vmax.f32 %v1086, 0.0
          %v1092 = vmax.f32 %v1089, 0.0
          %v1093 = vld [vmem:[#allocation16] sm:$0xff]
          %v1094 = vld [vmem:[#allocation16 + $0x8] sm:$0xff]
          %v1095 = vld [vmem:[#allocation16 + $0x10] sm:$0xff]
          %v1096 = vld [vmem:[#allocation16 + $0x18] sm:$0xff]
          %v1097 = vld [vmem:[#allocation18] sm:$0x1]
          %v1099 = vperm.slane %v1097, 0
          %v1102 = vsel %vm631, %v1091, 0
          %v1105 = vsel %vm631, %v1092, 0
          %1107 = vmatpush.msra.mxu0 0.0
          %1108 = vmatpush.msra.mxu0 0.0
          %1109 = vmatpush.msra.mxu0 0.0
          %1110 = vmatpush.msra.mxu0 0.0
          %1111 = vmatpush.msra.mxu0 0.0
          %1112 = vmatpush.msra.mxu0 0.0
          %1113 = vmatpush.msra.mxu0 0.0
          %1114 = vmatpush.msra.mxu0 0.0
          %1115 = vmatpush.msra.mxu0 0.0
          %1116 = vmatpush.msra.mxu0 0.0
          %1117 = vmatpush.msra.mxu0 0.0
          %1118 = vmatpush.msra.mxu0 0.0
          %1119 = vmatpush.msra.mxu0 %v1096
          %1120 = vmatpush.msra.mxu0 %v1095
          %1121 = vmatpush.msra.mxu0 %v1094
          %1122 = vmatpush.msra.mxu0 %v1093
          %1123 = vmatmul.f32.gmra.mxu0 %v1102
          %v1124 = vpop.f32.mrf.mxu0
          %v1125 = vadd.f32 %v1099, %v1124
          %1126 = vmatmul.f32.gmra.mxu0 %v1105
          %v1127 = vpop.f32.mrf.mxu0
          %v1128 = vadd.f32 %v1099, %v1127
          %1129 = vdwg.mxu0
          %1130 = vst.msk [vmem:[#allocation19] sm:$0xff] %vm631, %v1125
          %1131 = vst.msk [vmem:[#allocation19 + $0x8] sm:$0xff] %vm631, %v1128
        $region116: #{image_adapter_forward.1} parent=67 // pred_fallthru
          _
        // Predicated region
        $region117: #{image_adapter_forward.1} parent=67 // pred_check
          %p1132 = pneg %p331
        $region118: #{image_adapter_forward.1} parent=67 // pred_check_branch
          %1134 = sbr.rel (%p1132) target = $region120
        $region119: #{image_adapter_forward.1} parent=67 // pred_region
          %s1135 = smul.u32 2, %s33
          %1137 = vsyncadd [#allocation5], 0
          %s1138 = smul.addr %s1135, 8
          %s1139 = scalar_lea.hbm %s12, %s1138
          %s1140 = sshll.u32 [#allocation19], 4
          %s1141 = int_to_ptr.vmem [resolvable:$true] %s1140
          %s1142 = sshll.u32 %s1139, 4
          %s1143 = int_to_ptr.hbm [resolvable:$true] %s1142
          %1148 = dma.vmem_to_hbm [thread:$0]  %s1141, 256, %s1143, [#allocation5], 128, 128, 8
        $region120: #{image_adapter_forward.1} parent=67 // pred_fallthru
          _
        // Predicated region
        $region121: #{image_adapter_forward.1} parent=67 // pred_check
          %p1149 = pneg %p331
        $region122: #{image_adapter_forward.1} parent=67 // pred_check_branch
          %1151 = sbr.rel (%p1149) target = $region124
        $region123: #{image_adapter_forward.1} parent=67 // pred_region
          %1153 = dma.done [#allocation5], 256
        $region124: #{image_adapter_forward.1} parent=67 // pred_fallthru
          _
      $region68: #{image_adapter_forward.1} parent=5 // pred_fallthru
        _
      %p1154 = scmp.le.s32.totalorder 2, %s24
      // Predicated region
      $region125: #{image_adapter_forward.1} parent=5 // pred_check
        %p1155 = pneg %p1154
      $region126: #{image_adapter_forward.1} parent=5 // pred_check_branch
        %1157 = sbr.rel (%p1155) target = $region128
      $region127: #{image_adapter_forward.1} parent=5 // pred_region
        %s1158 = ssub.s32 %s24, 2
      $region128: #{image_adapter_forward.1} parent=5 // pred_fallthru
        _
    $region6: #{image_adapter_forward.1} parent=1 // loop_footer
      %s28 = sadd.s32 1, %s24
    $region7: #{image_adapter_forward.1} parent=1 // loop_footer_branch
      %23 = sbr.rel target = $region3
    $region8: #{image_adapter_forward.1} parent=1 // loop_exit
      _
    %1159 = vsyncpa [#allocation4], 1
    %s1160 = scalar_lea.sflag [#allocation4], 1
    %1161 = vsyncpa %s1160, 1
    %1162 = vsyncpa [#allocation7], 1
    %1163 = vsyncpa [#allocation11], 1
    %1164 = vsyncpa [#allocation14], 1
    %1165 = vsyncpa [#allocation17], 1
    %1166 = vsyncpa [#allocation5], 1
    %s1167 = scalar_lea.sflag [#allocation5], 1
    %1168 = vsyncpa %s1167, 1

</llo_original>
